<compile_context>
chip_gen: v7x
topology: tpu7x:2x2x1
jax: 0.10.0
libtpu: 0.0.40
codegen_flags: <defaults>
</compile_context>

<pallas_src>
import math

import jax
import jax.numpy as jnp
from jax.experimental import pallas as pl

# ----- small, self-consistent model dimensions ------------------------------
NUM_PLANES = 2        # in_channels (X and Y planes)
BASE_CHANNELS = 4
BOTTLENECK_SIZE = 32
H_IN, W_IN = 15, 16   # encodes to (4, 4) after two stride-2 convs, decodes back
H_ENC, W_ENC = 4, 4
BN_EPS = 1e-5
LEAKY_SLOPE = 0.01


def _conv_out(n):                      # k=3, stride=2, pad=1
    return (n + 2 - 3) // 2 + 1


H1, W1 = _conv_out(H_IN), _conv_out(W_IN)      # 8, 8
H2, W2 = _conv_out(H1), _conv_out(W1)          # 4, 4
assert (H2, W2) == (H_ENC, W_ENC)

# flattened (CHW) widths of each stage
D0 = NUM_PLANES * H_IN * W_IN                  # 480  input
D1 = BASE_CHANNELS * H1 * W1                   # 256  after enc conv1
D2 = 2 * BASE_CHANNELS * H2 * W2               # 128  after enc conv2 (== flat_dim)
D3 = BASE_CHANNELS * H1 * W1                   # 256  after dec convT1
D4 = NUM_PLANES * H_IN * W_IN                  # 480  output
D4P = 512                                      # lane-padded output width
CP = 8                                         # padded BN channel count

# ----- packed-operand row layouts (static, 8-row aligned) --------------------
# w256 : lane width 256
R_G1 = 0                    # g1    (D0, 256)
R_GMID = R_G1 + D0          # G_mid (D2, 256)
R_S1T = R_GMID + D2         # sel1t (CP, 256)
R_S3T = R_S1T + CP          # sel3t (CP, 256)
R_BMID = R_S3T + CP         # b_mid (1,  256)
W256_ROWS = ((R_BMID + 1 + 7) // 8) * 8        # 632
# w128 : lane width 128
R_G2 = 0                    # g2    (D1, 128)
R_S2T = R_G2 + D1           # sel2t (CP, 128)
W128_ROWS = R_S2T + CP                         # 264
# w512 : lane width 512
R_G4 = 0                    # g4    (D3, 512)
R_B4 = R_G4 + D3            # b4    (1,  512)
W512_ROWS = ((R_B4 + 1 + 7) // 8) * 8          # 264
# sel8 : lane width 8 (channel-sum matrices, 1/(B*HW) folded in)
S_SEL1 = 0                  # (D1, 8)
S_SEL2 = S_SEL1 + D1        # (D2, 8)
S_SEL3 = S_SEL2 + D2        # (D3, 8)
SEL8_ROWS = S_SEL3 + D3                        # 640


# ====================== parameter init (matches module's xavier init) =======

def xavier_uniform(key, shape, fan_in, fan_out):
    limit = (6.0 / (fan_in + fan_out)) ** 0.5
    return jax.random.uniform(key, shape, jnp.float32, -limit, limit)


def init_params(key):
    k = jax.random.split(key, 6)
    C, B1, B2 = NUM_PLANES, BASE_CHANNELS, 2 * BASE_CHANNELS
    flat_dim = B2 * H_ENC * W_ENC
    return {
        # encoder convs (PyTorch shapes: (C_out, C_in, k, k))
        "enc1_w": xavier_uniform(k[0], (B1, C, 3, 3), C * 9, B1 * 9),
        "enc1_b": jnp.zeros((B1,), jnp.float32),
        "enc2_w": xavier_uniform(k[1], (B2, B1, 3, 3), B1 * 9, B2 * 9),
        "enc2_b": jnp.zeros((B2,), jnp.float32),
        # fc layers (PyTorch shapes: (out, in))
        "fc_enc_w": xavier_uniform(k[2], (BOTTLENECK_SIZE, flat_dim), flat_dim, BOTTLENECK_SIZE),
        "fc_enc_b": jnp.zeros((BOTTLENECK_SIZE,), jnp.float32),
        "fc_dec_w": xavier_uniform(k[3], (flat_dim, BOTTLENECK_SIZE), BOTTLENECK_SIZE, flat_dim),
        "fc_dec_b": jnp.zeros((flat_dim,), jnp.float32),
        # decoder conv-transposes (PyTorch shapes: (C_in, C_out, k, k))
        "dec1_w": xavier_uniform(k[4], (B2, B1, 3, 3), B1 * 9, B2 * 9),
        "dec1_b": jnp.zeros((B1,), jnp.float32),
        "dec2_w": xavier_uniform(k[5], (B1, C, 3, 3), C * 9, B1 * 9),
        "dec2_b": jnp.zeros((C,), jnp.float32),
    }


# =============== weight preprocessing: fold convs into dense operators =======
# (pure JAX on the *weights* only — runs once, never on activations)

def conv2d_nchw(x, w, stride, padding):
    """nn.Conv2d forward (cross-correlation), NCHW / OIHW, symmetric padding, no bias."""
    return jax.lax.conv_general_dilated(
        x, w,
        window_strides=(stride, stride),
        padding=((padding, padding), (padding, padding)),
        dimension_numbers=("NCHW", "OIHW", "NCHW"))


def convT2d_nchw(x, w, stride, padding, output_padding):
    """nn.ConvTranspose2d forward, no bias.  w: (C_in, C_out, k, k) (PyTorch layout)."""
    k = w.shape[-1]
    lo = k - 1 - padding
    hi_h = k - 1 - padding + output_padding[0]
    hi_w = k - 1 - padding + output_padding[1]
    w_conv = jnp.transpose(w[:, :, ::-1, ::-1], (1, 0, 2, 3))  # flip -> (C_out, C_in, k, k)
    return jax.lax.conv_general_dilated(
        x, w_conv,
        window_strides=(1, 1),
        padding=((lo, hi_h), (lo, hi_w)),
        lhs_dilation=(stride, stride),
        dimension_numbers=("NCHW", "OIHW", "NCHW"))


def linear_operator(apply_fn, in_shape):
    """Fold a linear NCHW->NCHW map into a dense matrix G (CHW-flatten order):
    flat_out = flat_in @ G.  Built by applying the map to an identity basis batch."""
    d_in = math.prod(in_shape)
    basis = jnp.eye(d_in, dtype=jnp.float32).reshape((d_in,) + tuple(in_shape))
    out = apply_fn(basis)                                     # (d_in, C_out, Ho, Wo)
    out_shape = tuple(int(s) for s in out.shape[1:])
    return out.reshape(d_in, -1), out_shape


def prepare_operators(params, batch_size):
    """One-time offline algebra + packing of all kernel constants (f32)."""
    C, B1, B2 = NUM_PLANES, BASE_CHANNELS, 2 * BASE_CHANNELS

    g1, s1 = linear_operator(lambda t: conv2d_nchw(t, params["enc1_w"], 2, 1),
                             (C, H_IN, W_IN))
    g2, s2 = linear_operator(lambda t: conv2d_nchw(t, params["enc2_w"], 2, 1), s1)
    g3, s3 = linear_operator(
        lambda t: convT2d_nchw(t, params["dec1_w"], 2, 1, (1, 1)), s2)
    g4, s4 = linear_operator(
        lambda t: convT2d_nchw(t, params["dec2_w"], 2, 1, (0, 1)), s3)

    assert s1 == (B1, H1, W1) and s2 == (B2, H_ENC, W_ENC)
    assert s3 == (B1, H1, W1) and s4 == (C, H_IN, W_IN)
    assert g1.shape == (D0, D1) and g2.shape == (D1, D2)
    assert g3.shape == (D2, D3) and g4.shape == (D3, D4)

    hw1, hw2, hw3, hw4 = H1 * W1, H_ENC * W_ENC, H1 * W1, H_IN * W_IN

    # --- offline algebra ------------------------------------------------------
    # fc_enc -> fc_dec -> convT1 has no nonlinearity in between: fold to one op.
    # The dec1 conv bias (per-channel constant) is cancelled by BN3 and dropped;
    # the fc biases are spatially varying after g3 so they must be kept.
    # (Fold is in f32; operators are f32 so an f64 fold gains nothing here.)
    wfe, bfe = params["fc_enc_w"].T, params["fc_enc_b"]       # (D2,32), (32,)
    wfd, bfd = params["fc_dec_w"].T, params["fc_dec_b"]       # (32,D2), (D2,)
    g_mid = wfe @ (wfd @ g3)                                  # (D2, D3)
    b_mid = ((bfe @ wfd) + bfd) @ g3                          # (D3,)
    b_out = jnp.repeat(params["dec2_b"], hw4)                 # (D4,)

    # lane-pad the output operator 480 -> 512 (unmasked final stores)
    g4p = jnp.pad(g4, ((0, 0), (0, D4P - D4)))
    b4p = jnp.pad(b_out, (0, D4P - D4))[None, :]

    # BN channel-sum / broadcast matrices (channel dim padded to CP=8;
    # 1/(B*HW) folded into the channel-sum matrix).
    def sel_pair(c, hw):
        sel = jnp.repeat(jnp.eye(c, dtype=jnp.float32), hw, axis=0)    # (c*hw, c)
        sel_s = jnp.pad(sel, ((0, 0), (0, CP - c))) / float(batch_size * hw)
        sel_t = jnp.pad(sel.T, ((0, CP - c), (0, 0)))
        return sel_s, sel_t

    s1s, s1t = sel_pair(s1[0], hw1)
    s2s, s2t = sel_pair(s2[0], hw2)
    s3s, s3t = sel_pair(s3[0], hw3)

    def pack(blocks, total_rows):
        buf = jnp.concatenate(blocks, axis=0)
        return jnp.pad(buf, ((0, total_rows - buf.shape[0]), (0, 0)))

    packed = dict(
        w256=pack([g1, g_mid, s1t, s3t, b_mid[None, :]], W256_ROWS),   # (632, 256)
        w128=pack([g2, s2t], W128_ROWS),                               # (264, 128)
        w512=pack([g4p, b4p], W512_ROWS),                              # (264, 512)
        sel8=jnp.concatenate([s1s, s2s, s3s], axis=0),                 # (640,   8)
    )
    assert packed["sel8"].shape == (SEL8_ROWS, CP)
    return packed


# ======================= the single fused Pallas kernel ======================

def _stack2(r0, r1):
    """Stack two (1, N) rows into a (2, N) value (VPU select; no concat needed)."""
    row = jax.lax.broadcasted_iota(jnp.int32, (2, r0.shape[1]), 0)
    return jnp.where(row == 0, r0, r1)


def fused_kernel(x_ref, w256_ref, w128_ref, w512_ref, sel8_ref, o_ref):
    f32 = jnp.float32

    def bn_leaky(h, sel_s, sel_t):
        # Training-mode BatchNorm (weight=1, bias=0, biased var) + LeakyReLU.
        # Two side matmuls total: (2,D)@(D,8) for [mean; E[x^2]] and
        # (2,8)@(8,D) for the broadcast of [a; b]; 1/(B*HW) is folded into sel_s.
        stats = _stack2(jnp.sum(h, axis=0, keepdims=True),
                        jnp.sum(h * h, axis=0, keepdims=True))          # (2, D)
        mom = jnp.dot(stats, sel_s, preferred_element_type=f32)         # (2, CP)
        mean_c = mom[0:1, :]
        a_c = jax.lax.rsqrt(mom[1:2, :] - mean_c * mean_c + BN_EPS)     # (1, CP)
        ab = jnp.dot(_stack2(a_c, -mean_c * a_c), sel_t,
                     preferred_element_type=f32)                        # (2, D)
        y = h * ab[0:1, :] + ab[1:2, :]
        return jnp.where(y >= 0, y, LEAKY_SLOPE * y)

    # encoder (conv biases dropped: per-channel constants are cancelled by BN)
    h = jnp.dot(x_ref[...], w256_ref[R_G1:R_G1 + D0, :],
                preferred_element_type=f32)                              # (B, D1)
    h = bn_leaky(h, sel8_ref[S_SEL1:S_SEL1 + D1, :], w256_ref[R_S1T:R_S1T + CP, :])
    h = jnp.dot(h, w128_ref[R_G2:R_G2 + D1, :],
                preferred_element_type=f32)                              # (B, D2)
    h = bn_leaky(h, sel8_ref[S_SEL2:S_SEL2 + D2, :], w128_ref[R_S2T:R_S2T + CP, :])
    # fc_enc -> fc_dec -> convT1 folded into one operator (latent never materialized)
    h = jnp.dot(h, w256_ref[R_GMID:R_GMID + D2, :],
                preferred_element_type=f32) + w256_ref[R_BMID:R_BMID + 1, :]  # (B, D3)
    h = bn_leaky(h, sel8_ref[S_SEL3:S_SEL3 + D3, :], w256_ref[R_S3T:R_S3T + CP, :])
    # final convT, output lane-padded to 512 for an unmasked store
    o_ref[...] = jnp.dot(h, w512_ref[R_G4:R_G4 + D3, :],
                         preferred_element_type=f32) + w512_ref[R_B4:R_B4 + 1, :]


def forward(x_nchw, packed):
    """NCHW in -> NCHW out; the whole forward is one pallas_call."""
    B = x_nchw.shape[0]
    x_flat = x_nchw.reshape(B, D0).astype(jnp.float32)        # CHW flatten

    flops = 2 * B * (D0 * D1 + D1 * D2 + D2 * D3 + D3 * D4P) \
        + 2 * 2 * 2 * CP * (D1 + D2 + D3)                      # BN side matmuls
    bytes_accessed = 4 * (x_flat.size + packed["w256"].size + packed["w128"].size
                          + packed["w512"].size + packed["sel8"].size + B * D4P)

    # No grid / no BlockSpecs: every operand is a single whole-array VMEM block
    # (working set ~1.4 MB, far below every generation's VMEM; nothing to pipeline).
    out_padded = pl.pallas_call(
        fused_kernel,
        out_shape=jax.ShapeDtypeStruct((B, D4P), jnp.float32),
        cost_estimate=pl.CostEstimate(flops=int(flops),
                                      transcendentals=3 * CP,
                                      bytes_accessed=int(bytes_accessed)),
    )(x_flat, packed["w256"], packed["w128"], packed["w512"], packed["sel8"])

    return out_padded[:, :D4].reshape(B, NUM_PLANES, H_IN, W_IN)


# =================== pure-JAX reference (for correctness check) ==============

def reference_forward(x, p):
    def bn_leaky_nchw(y):
        mean = jnp.mean(y, axis=(0, 2, 3), keepdims=True)
        var = jnp.mean((y - mean) ** 2, axis=(0, 2, 3), keepdims=True)
        z = (y - mean) * jax.lax.rsqrt(var + BN_EPS)
        return jnp.where(z >= 0, z, LEAKY_SLOPE * z)

    B = x.shape[0]
    y = conv2d_nchw(x, p["enc1_w"], 2, 1) + p["enc1_b"][None, :, None, None]
    y = bn_leaky_nchw(y)
    y = conv2d_nchw(y, p["enc2_w"], 2, 1) + p["enc2_b"][None, :, None, None]
    y = bn_leaky_nchw(y)
    flat = y.reshape(B, -1)
    lat = flat @ p["fc_enc_w"].T + p["fc_enc_b"]
    d = lat @ p["fc_dec_w"].T + p["fc_dec_b"]
    d = d.reshape(B, 2 * BASE_CHANNELS, H_ENC, W_ENC)
    y = convT2d_nchw(d, p["dec1_w"], 2, 1, (1, 1)) + p["dec1_b"][None, :, None, None]
    y = bn_leaky_nchw(y)
    y = convT2d_nchw(y, p["dec2_w"], 2, 1, (0, 1)) + p["dec2_b"][None, :, None, None]
    return y


# ==================================== main ===================================

if __name__ == "__main__":
    key = jax.random.PRNGKey(0)
    k_params, k_x = jax.random.split(key)
    params = init_params(k_params)
    x = jax.random.normal(k_x, (2, NUM_PLANES, H_IN, W_IN), jnp.float32)

    packed = prepare_operators(params, batch_size=x.shape[0])   # one-time prep
    fwd = jax.jit(forward)
    out = fwd(x, packed)                                        # single fused kernel
    out = jax.block_until_ready(out)

    assert out.shape == x.shape, (out.shape, x.shape)
    assert bool(jnp.all(jnp.isfinite(out)))

    # numerical check against a pure-JAX/XLA implementation of the same module
    ref = reference_forward(x, params)
    max_err = float(jnp.max(jnp.abs(out - ref)))
    assert max_err < 3e-3, max_err

    print("KERNEL_OK")
</pallas_src>

<mosaic_0001>
module attributes {stable_mosaic.version = 11 : i64} {
  func.func @fused_kernel(%arg0: memref<2x480xf32, #tpu.memory_space<vmem>>, %arg1: memref<632x256xf32, #tpu.memory_space<vmem>>, %arg2: memref<264x128xf32, #tpu.memory_space<vmem>>, %arg3: memref<264x512xf32, #tpu.memory_space<vmem>>, %arg4: memref<640x8xf32, #tpu.memory_space<vmem>>, %arg5: memref<2x512xf32, #tpu.memory_space<vmem>>) attributes {dimension_semantics = [], scalar_prefetch = 0 : i64, scratch_operands = 0 : i64, tpu.core_type = #tpu.core_type<tc>} {
    %c0 = arith.constant 0 : index
    %c0_0 = arith.constant 0 : index
    %0 = vector.load %arg0[%c0, %c0_0] : memref<2x480xf32, #tpu.memory_space<vmem>>, vector<2x480xf32>
    %c0_1 = arith.constant 0 : index
    %c0_2 = arith.constant 0 : index
    %1 = vector.load %arg1[%c0_1, %c0_2] : memref<632x256xf32, #tpu.memory_space<vmem>>, vector<480x256xf32>
    %cst = arith.constant dense<0.000000e+00> : vector<2x256xf32>
    %2 = tpu.matmul %0, %1, %cst {dimension_numbers = #tpu.dot_dimension_numbers<[1], [0], [0], [1], [0, 0, 1, 1], [], []>} : vector<2x480xf32>, vector<480x256xf32>, vector<2x256xf32> -> vector<2x256xf32>
    %c0_3 = arith.constant 0 : index
    %c0_4 = arith.constant 0 : index
    %3 = vector.load %arg4[%c0_3, %c0_4] : memref<640x8xf32, #tpu.memory_space<vmem>>, vector<256x8xf32>
    %c608 = arith.constant 608 : index
    %c0_5 = arith.constant 0 : index
    %4 = vector.load %arg1[%c608, %c0_5] : memref<632x256xf32, #tpu.memory_space<vmem>>, vector<8x256xf32>
    %cst_6 = arith.constant dense<0.000000e+00> : vector<256xf32>
    %5 = vector.multi_reduction <add>, %2, %cst_6 [0] : vector<2x256xf32> to vector<256xf32>
    %6 = vector.shape_cast %5 : vector<256xf32> to vector<1x256xf32>
    %7 = arith.mulf %2, %2 : vector<2x256xf32>
    %cst_7 = arith.constant dense<0.000000e+00> : vector<256xf32>
    %8 = vector.multi_reduction <add>, %7, %cst_7 [0] : vector<2x256xf32> to vector<256xf32>
    %9 = vector.shape_cast %8 : vector<256xf32> to vector<1x256xf32>
    %10 = tpu.iota {dimensions = array<i32: 0>} : vector<2x256xi32>
    %c0_i32 = arith.constant 0 : i32
    %11 = vector.broadcast %c0_i32 : i32 to vector<2x256xi32>
    %12 = arith.cmpi eq, %10, %11 : vector<2x256xi32>
    %13 = vector.shape_cast %6 : vector<1x256xf32> to vector<1x256xf32>
    %14 = vector.broadcast %13 : vector<1x256xf32> to vector<2x256xf32>
    %15 = vector.shape_cast %9 : vector<1x256xf32> to vector<1x256xf32>
    %16 = vector.broadcast %15 : vector<1x256xf32> to vector<2x256xf32>
    %17 = arith.select %12, %14, %16 : vector<2x256xi1>, vector<2x256xf32>
    %cst_8 = arith.constant dense<0.000000e+00> : vector<2x8xf32>
    %18 = tpu.matmul %17, %3, %cst_8 {dimension_numbers = #tpu.dot_dimension_numbers<[1], [0], [0], [1], [0, 0, 1, 1], [], []>} : vector<2x256xf32>, vector<256x8xf32>, vector<2x8xf32> -> vector<2x8xf32>
    %19 = vector.extract_strided_slice %18 {offsets = [0, 0], sizes = [1, 8], strides = [1, 1]} : vector<2x8xf32> to vector<1x8xf32>
    %20 = vector.extract_strided_slice %18 {offsets = [1, 0], sizes = [1, 8], strides = [1, 1]} : vector<2x8xf32> to vector<1x8xf32>
    %21 = arith.mulf %19, %19 : vector<1x8xf32>
    %22 = arith.subf %20, %21 : vector<1x8xf32>
    %cst_9 = arith.constant 9.99999974E-6 : f32
    %23 = vector.broadcast %cst_9 : f32 to vector<1x8xf32>
    %24 = arith.addf %22, %23 : vector<1x8xf32>
    %25 = math.rsqrt %24 : vector<1x8xf32>
    %cst_10 = arith.constant 0.000000e+00 : f32
    %26 = vector.broadcast %cst_10 : f32 to vector<1x8xf32>
    %27 = arith.subf %26, %19 : vector<1x8xf32>
    %28 = arith.mulf %27, %25 : vector<1x8xf32>
    %29 = tpu.iota {dimensions = array<i32: 0>} : vector<2x8xi32>
    %c0_i32_11 = arith.constant 0 : i32
    %30 = vector.broadcast %c0_i32_11 : i32 to vector<2x8xi32>
    %31 = arith.cmpi eq, %29, %30 : vector<2x8xi32>
    %32 = vector.shape_cast %25 : vector<1x8xf32> to vector<1x8xf32>
    %33 = vector.broadcast %32 : vector<1x8xf32> to vector<2x8xf32>
    %34 = vector.shape_cast %28 : vector<1x8xf32> to vector<1x8xf32>
    %35 = vector.broadcast %34 : vector<1x8xf32> to vector<2x8xf32>
    %36 = arith.select %31, %33, %35 : vector<2x8xi1>, vector<2x8xf32>
    %cst_12 = arith.constant dense<0.000000e+00> : vector<2x256xf32>
    %37 = tpu.matmul %36, %4, %cst_12 {dimension_numbers = #tpu.dot_dimension_numbers<[1], [0], [0], [1], [0, 0, 1, 1], [], []>} : vector<2x8xf32>, vector<8x256xf32>, vector<2x256xf32> -> vector<2x256xf32>
    %38 = vector.extract_strided_slice %37 {offsets = [0, 0], sizes = [1, 256], strides = [1, 1]} : vector<2x256xf32> to vector<1x256xf32>
    %39 = vector.broadcast %38 : vector<1x256xf32> to vector<2x256xf32>
    %40 = arith.mulf %2, %39 : vector<2x256xf32>
    %41 = vector.extract_strided_slice %37 {offsets = [1, 0], sizes = [1, 256], strides = [1, 1]} : vector<2x256xf32> to vector<1x256xf32>
    %42 = vector.broadcast %41 : vector<1x256xf32> to vector<2x256xf32>
    %43 = arith.addf %40, %42 : vector<2x256xf32>
    %cst_13 = arith.constant 0.000000e+00 : f32
    %44 = vector.broadcast %cst_13 : f32 to vector<2x256xf32>
    %45 = arith.cmpf oge, %43, %44 : vector<2x256xf32>
    %cst_14 = arith.constant 0.00999999977 : f32
    %46 = vector.broadcast %cst_14 : f32 to vector<2x256xf32>
    %47 = arith.mulf %46, %43 : vector<2x256xf32>
    %48 = arith.select %45, %43, %47 : vector<2x256xi1>, vector<2x256xf32>
    %c0_15 = arith.constant 0 : index
    %c0_16 = arith.constant 0 : index
    %49 = vector.load %arg2[%c0_15, %c0_16] : memref<264x128xf32, #tpu.memory_space<vmem>>, vector<256x128xf32>
    %cst_17 = arith.constant dense<0.000000e+00> : vector<2x128xf32>
    %50 = tpu.matmul %48, %49, %cst_17 {dimension_numbers = #tpu.dot_dimension_numbers<[1], [0], [0], [1], [0, 0, 1, 1], [], []>} : vector<2x256xf32>, vector<256x128xf32>, vector<2x128xf32> -> vector<2x128xf32>
    %c256 = arith.constant 256 : index
    %c0_18 = arith.constant 0 : index
    %51 = vector.load %arg4[%c256, %c0_18] : memref<640x8xf32, #tpu.memory_space<vmem>>, vector<128x8xf32>
    %c256_19 = arith.constant 256 : index
    %c0_20 = arith.constant 0 : index
    %52 = vector.load %arg2[%c256_19, %c0_20] : memref<264x128xf32, #tpu.memory_space<vmem>>, vector<8x128xf32>
    %cst_21 = arith.constant dense<0.000000e+00> : vector<128xf32>
    %53 = vector.multi_reduction <add>, %50, %cst_21 [0] : vector<2x128xf32> to vector<128xf32>
    %54 = vector.shape_cast %53 : vector<128xf32> to vector<1x128xf32>
    %55 = arith.mulf %50, %50 : vector<2x128xf32>
    %cst_22 = arith.constant dense<0.000000e+00> : vector<128xf32>
    %56 = vector.multi_reduction <add>, %55, %cst_22 [0] : vector<2x128xf32> to vector<128xf32>
    %57 = vector.shape_cast %56 : vector<128xf32> to vector<1x128xf32>
    %58 = tpu.iota {dimensions = array<i32: 0>} : vector<2x128xi32>
    %c0_i32_23 = arith.constant 0 : i32
    %59 = vector.broadcast %c0_i32_23 : i32 to vector<2x128xi32>
    %60 = arith.cmpi eq, %58, %59 : vector<2x128xi32>
    %61 = vector.shape_cast %54 : vector<1x128xf32> to vector<1x128xf32>
    %62 = vector.broadcast %61 : vector<1x128xf32> to vector<2x128xf32>
    %63 = vector.shape_cast %57 : vector<1x128xf32> to vector<1x128xf32>
    %64 = vector.broadcast %63 : vector<1x128xf32> to vector<2x128xf32>
    %65 = arith.select %60, %62, %64 : vector<2x128xi1>, vector<2x128xf32>
    %cst_24 = arith.constant dense<0.000000e+00> : vector<2x8xf32>
    %66 = tpu.matmul %65, %51, %cst_24 {dimension_numbers = #tpu.dot_dimension_numbers<[1], [0], [0], [1], [0, 0, 1, 1], [], []>} : vector<2x128xf32>, vector<128x8xf32>, vector<2x8xf32> -> vector<2x8xf32>
    %67 = vector.extract_strided_slice %66 {offsets = [0, 0], sizes = [1, 8], strides = [1, 1]} : vector<2x8xf32> to vector<1x8xf32>
    %68 = vector.extract_strided_slice %66 {offsets = [1, 0], sizes = [1, 8], strides = [1, 1]} : vector<2x8xf32> to vector<1x8xf32>
    %69 = arith.mulf %67, %67 : vector<1x8xf32>
    %70 = arith.subf %68, %69 : vector<1x8xf32>
    %cst_25 = arith.constant 9.99999974E-6 : f32
    %71 = vector.broadcast %cst_25 : f32 to vector<1x8xf32>
    %72 = arith.addf %70, %71 : vector<1x8xf32>
    %73 = math.rsqrt %72 : vector<1x8xf32>
    %cst_26 = arith.constant 0.000000e+00 : f32
    %74 = vector.broadcast %cst_26 : f32 to vector<1x8xf32>
    %75 = arith.subf %74, %67 : vector<1x8xf32>
    %76 = arith.mulf %75, %73 : vector<1x8xf32>
    %77 = tpu.iota {dimensions = array<i32: 0>} : vector<2x8xi32>
    %c0_i32_27 = arith.constant 0 : i32
    %78 = vector.broadcast %c0_i32_27 : i32 to vector<2x8xi32>
    %79 = arith.cmpi eq, %77, %78 : vector<2x8xi32>
    %80 = vector.shape_cast %73 : vector<1x8xf32> to vector<1x8xf32>
    %81 = vector.broadcast %80 : vector<1x8xf32> to vector<2x8xf32>
    %82 = vector.shape_cast %76 : vector<1x8xf32> to vector<1x8xf32>
    %83 = vector.broadcast %82 : vector<1x8xf32> to vector<2x8xf32>
    %84 = arith.select %79, %81, %83 : vector<2x8xi1>, vector<2x8xf32>
    %cst_28 = arith.constant dense<0.000000e+00> : vector<2x128xf32>
    %85 = tpu.matmul %84, %52, %cst_28 {dimension_numbers = #tpu.dot_dimension_numbers<[1], [0], [0], [1], [0, 0, 1, 1], [], []>} : vector<2x8xf32>, vector<8x128xf32>, vector<2x128xf32> -> vector<2x128xf32>
    %86 = vector.extract_strided_slice %85 {offsets = [0, 0], sizes = [1, 128], strides = [1, 1]} : vector<2x128xf32> to vector<1x128xf32>
    %87 = vector.broadcast %86 : vector<1x128xf32> to vector<2x128xf32>
    %88 = arith.mulf %50, %87 : vector<2x128xf32>
    %89 = vector.extract_strided_slice %85 {offsets = [1, 0], sizes = [1, 128], strides = [1, 1]} : vector<2x128xf32> to vector<1x128xf32>
    %90 = vector.broadcast %89 : vector<1x128xf32> to vector<2x128xf32>
    %91 = arith.addf %88, %90 : vector<2x128xf32>
    %cst_29 = arith.constant 0.000000e+00 : f32
    %92 = vector.broadcast %cst_29 : f32 to vector<2x128xf32>
    %93 = arith.cmpf oge, %91, %92 : vector<2x128xf32>
    %cst_30 = arith.constant 0.00999999977 : f32
    %94 = vector.broadcast %cst_30 : f32 to vector<2x128xf32>
    %95 = arith.mulf %94, %91 : vector<2x128xf32>
    %96 = arith.select %93, %91, %95 : vector<2x128xi1>, vector<2x128xf32>
    %c480 = arith.constant 480 : index
    %c0_31 = arith.constant 0 : index
    %97 = vector.load %arg1[%c480, %c0_31] : memref<632x256xf32, #tpu.memory_space<vmem>>, vector<128x256xf32>
    %cst_32 = arith.constant dense<0.000000e+00> : vector<2x256xf32>
    %98 = tpu.matmul %96, %97, %cst_32 {dimension_numbers = #tpu.dot_dimension_numbers<[1], [0], [0], [1], [0, 0, 1, 1], [], []>} : vector<2x128xf32>, vector<128x256xf32>, vector<2x256xf32> -> vector<2x256xf32>
    %c624 = arith.constant 624 : index
    %c0_33 = arith.constant 0 : index
    %99 = vector.load %arg1[%c624, %c0_33] : memref<632x256xf32, #tpu.memory_space<vmem>>, vector<1x256xf32>
    %100 = vector.broadcast %99 : vector<1x256xf32> to vector<2x256xf32>
    %101 = arith.addf %98, %100 : vector<2x256xf32>
    %c384 = arith.constant 384 : index
    %c0_34 = arith.constant 0 : index
    %102 = vector.load %arg4[%c384, %c0_34] : memref<640x8xf32, #tpu.memory_space<vmem>>, vector<256x8xf32>
    %c616 = arith.constant 616 : index
    %c0_35 = arith.constant 0 : index
    %103 = vector.load %arg1[%c616, %c0_35] : memref<632x256xf32, #tpu.memory_space<vmem>>, vector<8x256xf32>
    %cst_36 = arith.constant dense<0.000000e+00> : vector<256xf32>
    %104 = vector.multi_reduction <add>, %101, %cst_36 [0] : vector<2x256xf32> to vector<256xf32>
    %105 = vector.shape_cast %104 : vector<256xf32> to vector<1x256xf32>
    %106 = arith.mulf %101, %101 : vector<2x256xf32>
    %cst_37 = arith.constant dense<0.000000e+00> : vector<256xf32>
    %107 = vector.multi_reduction <add>, %106, %cst_37 [0] : vector<2x256xf32> to vector<256xf32>
    %108 = vector.shape_cast %107 : vector<256xf32> to vector<1x256xf32>
    %109 = tpu.iota {dimensions = array<i32: 0>} : vector<2x256xi32>
    %c0_i32_38 = arith.constant 0 : i32
    %110 = vector.broadcast %c0_i32_38 : i32 to vector<2x256xi32>
    %111 = arith.cmpi eq, %109, %110 : vector<2x256xi32>
    %112 = vector.shape_cast %105 : vector<1x256xf32> to vector<1x256xf32>
    %113 = vector.broadcast %112 : vector<1x256xf32> to vector<2x256xf32>
    %114 = vector.shape_cast %108 : vector<1x256xf32> to vector<1x256xf32>
    %115 = vector.broadcast %114 : vector<1x256xf32> to vector<2x256xf32>
    %116 = arith.select %111, %113, %115 : vector<2x256xi1>, vector<2x256xf32>
    %cst_39 = arith.constant dense<0.000000e+00> : vector<2x8xf32>
    %117 = tpu.matmul %116, %102, %cst_39 {dimension_numbers = #tpu.dot_dimension_numbers<[1], [0], [0], [1], [0, 0, 1, 1], [], []>} : vector<2x256xf32>, vector<256x8xf32>, vector<2x8xf32> -> vector<2x8xf32>
    %118 = vector.extract_strided_slice %117 {offsets = [0, 0], sizes = [1, 8], strides = [1, 1]} : vector<2x8xf32> to vector<1x8xf32>
    %119 = vector.extract_strided_slice %117 {offsets = [1, 0], sizes = [1, 8], strides = [1, 1]} : vector<2x8xf32> to vector<1x8xf32>
    %120 = arith.mulf %118, %118 : vector<1x8xf32>
    %121 = arith.subf %119, %120 : vector<1x8xf32>
    %cst_40 = arith.constant 9.99999974E-6 : f32
    %122 = vector.broadcast %cst_40 : f32 to vector<1x8xf32>
    %123 = arith.addf %121, %122 : vector<1x8xf32>
    %124 = math.rsqrt %123 : vector<1x8xf32>
    %cst_41 = arith.constant 0.000000e+00 : f32
    %125 = vector.broadcast %cst_41 : f32 to vector<1x8xf32>
    %126 = arith.subf %125, %118 : vector<1x8xf32>
    %127 = arith.mulf %126, %124 : vector<1x8xf32>
    %128 = tpu.iota {dimensions = array<i32: 0>} : vector<2x8xi32>
    %c0_i32_42 = arith.constant 0 : i32
    %129 = vector.broadcast %c0_i32_42 : i32 to vector<2x8xi32>
    %130 = arith.cmpi eq, %128, %129 : vector<2x8xi32>
    %131 = vector.shape_cast %124 : vector<1x8xf32> to vector<1x8xf32>
    %132 = vector.broadcast %131 : vector<1x8xf32> to vector<2x8xf32>
    %133 = vector.shape_cast %127 : vector<1x8xf32> to vector<1x8xf32>
    %134 = vector.broadcast %133 : vector<1x8xf32> to vector<2x8xf32>
    %135 = arith.select %130, %132, %134 : vector<2x8xi1>, vector<2x8xf32>
    %cst_43 = arith.constant dense<0.000000e+00> : vector<2x256xf32>
    %136 = tpu.matmul %135, %103, %cst_43 {dimension_numbers = #tpu.dot_dimension_numbers<[1], [0], [0], [1], [0, 0, 1, 1], [], []>} : vector<2x8xf32>, vector<8x256xf32>, vector<2x256xf32> -> vector<2x256xf32>
    %137 = vector.extract_strided_slice %136 {offsets = [0, 0], sizes = [1, 256], strides = [1, 1]} : vector<2x256xf32> to vector<1x256xf32>
    %138 = vector.broadcast %137 : vector<1x256xf32> to vector<2x256xf32>
    %139 = arith.mulf %101, %138 : vector<2x256xf32>
    %140 = vector.extract_strided_slice %136 {offsets = [1, 0], sizes = [1, 256], strides = [1, 1]} : vector<2x256xf32> to vector<1x256xf32>
    %141 = vector.broadcast %140 : vector<1x256xf32> to vector<2x256xf32>
    %142 = arith.addf %139, %141 : vector<2x256xf32>
    %cst_44 = arith.constant 0.000000e+00 : f32
    %143 = vector.broadcast %cst_44 : f32 to vector<2x256xf32>
    %144 = arith.cmpf oge, %142, %143 : vector<2x256xf32>
    %cst_45 = arith.constant 0.00999999977 : f32
    %145 = vector.broadcast %cst_45 : f32 to vector<2x256xf32>
    %146 = arith.mulf %145, %142 : vector<2x256xf32>
    %147 = arith.select %144, %142, %146 : vector<2x256xi1>, vector<2x256xf32>
    %c0_46 = arith.constant 0 : index
    %c0_47 = arith.constant 0 : index
    %148 = vector.load %arg3[%c0_46, %c0_47] : memref<264x512xf32, #tpu.memory_space<vmem>>, vector<256x512xf32>
    %cst_48 = arith.constant dense<0.000000e+00> : vector<2x512xf32>
    %149 = tpu.matmul %147, %148, %cst_48 {dimension_numbers = #tpu.dot_dimension_numbers<[1], [0], [0], [1], [0, 0, 1, 1], [], []>} : vector<2x256xf32>, vector<256x512xf32>, vector<2x512xf32> -> vector<2x512xf32>
    %c256_49 = arith.constant 256 : index
    %c0_50 = arith.constant 0 : index
    %150 = vector.load %arg3[%c256_49, %c0_50] : memref<264x512xf32, #tpu.memory_space<vmem>>, vector<1x512xf32>
    %151 = vector.broadcast %150 : vector<1x512xf32> to vector<2x512xf32>
    %152 = arith.addf %149, %151 : vector<2x512xf32>
    %c0_51 = arith.constant 0 : index
    %c0_52 = arith.constant 0 : index
    %153 = vector.load %arg5[%c0_51, %c0_52] : memref<2x512xf32, #tpu.memory_space<vmem>>, vector<2x512xf32>
    tpu.vector_store %arg5[%c0_51, %c0_52], %152 {strides = array<i32>} : memref<2x512xf32, #tpu.memory_space<vmem>>, vector<2x512xf32>,
    return
  }
}

</mosaic_0001>

<llo_original>
// kernel: forward.1
$region0: #{forward.1}
  #allocation0 [shape = 'u32[]', space=smem, size = 0x4, offset = 0x4, fixed_abs, tag = 'smem constant byte address 0x4 - core index']
  #allocation1 [shape = 'u32[144,128]{1,0:T(1,128)}', space=vmem, size = 0x12000, scoped, tag = 'internal scratch']
  %s0 = inlined_call_operand.vmem [shape: f32[2,480], index: 0, kind: input, shape index: {}]
  %s1 = inlined_call_operand.hbm [shape: f32[632,256], index: 1, kind: input, shape index: {}]
  %s2 = inlined_call_operand.vmem [shape: f32[264,128], index: 2, kind: input, shape index: {}]
  %s3 = inlined_call_operand.hbm [shape: f32[264,512], index: 3, kind: input, shape index: {}]
  %s4 = inlined_call_operand.vmem [shape: f32[640,8], index: 4, kind: input, shape index: {}]
  %s5 = inlined_call_operand.vmem [shape: f32[2,512], index: 5, kind: output, shape index: {}]
  %s6 = sld [smem:[#allocation0]]
  $region38: #{forward.1} parent=0
    _
  %s8 = ssub.s32 1, %s6
  %s9 = scalar_select 0, %s8, %s6
  $region1: #{forward.1} parent=0
    #allocation2 [shape = 'u8[647168]{0}', space=vmem, size = 0x9e000, scoped, tag = 'input window, operand 1, single buffered']
    #allocation3 [shape = 's32[1]{0}', space=sflag, size = 0x4, scoped, tag = 'scoped memory for forward.1']
    #allocation4 [shape = 'u8[540672]{0}', space=vmem, size = 0x84000, scoped, tag = 'input window, operand 3, single buffered']
    #allocation5 [shape = 's32[1]{0}', space=sflag, size = 0x4, scoped, tag = 'scoped memory for forward.1']
    %10 = vsyncpa [#allocation3], 0
    %11 = vsyncpa [#allocation5], 0
    // Predicated region
    $region2: #{forward.1} parent=1 // pred_check
      _
    $region3: #{forward.1} parent=1 // pred_check_branch
      %13 = sbr.rel (0) target = $region5
    $region4: #{forward.1} parent=1 // pred_region
      _
    $region5: #{forward.1} parent=1 // pred_fallthru
      _
    // Predicated region
    $region6: #{forward.1} parent=1 // pred_check
      _
    $region7: #{forward.1} parent=1 // pred_check_branch
      %15 = sbr.rel (0) target = $region9
    $region8: #{forward.1} parent=1 // pred_region
      %s17 = ssub.s32 20224, 20224
      %18 = vsyncadd [#allocation3], %s17
      %s19 = sshll.u32 [#allocation2], 4
      %s20 = int_to_ptr.vmem [resolvable:$true] %s19
      %25 = dma.hbm_to_vmem [thread:$0]  %s1, 20224, %s20, [#allocation3], 256, 256, 16
    $region9: #{forward.1} parent=1 // pred_fallthru
      _
    // Predicated region
    $region10: #{forward.1} parent=1 // pred_check
      _
    $region11: #{forward.1} parent=1 // pred_check_branch
      %27 = sbr.rel (0) target = $region13
    $region12: #{forward.1} parent=1 // pred_region
      _
    $region13: #{forward.1} parent=1 // pred_fallthru
      _
    // Predicated region
    $region14: #{forward.1} parent=1 // pred_check
      _
    $region15: #{forward.1} parent=1 // pred_check_branch
      %29 = sbr.rel (0) target = $region17
    $region16: #{forward.1} parent=1 // pred_region
      %s31 = ssub.s32 16896, 16896
      %32 = vsyncadd [#allocation5], %s31
      %s33 = sshll.u32 [#allocation4], 4
      %s34 = int_to_ptr.vmem [resolvable:$true] %s33
      %39 = dma.hbm_to_vmem [thread:$0]  %s3, 16896, %s34, [#allocation5], 512, 512, 32
    $region17: #{forward.1} parent=1 // pred_fallthru
      _
    // Predicated region
    $region18: #{forward.1} parent=1 // pred_check
      _
    $region19: #{forward.1} parent=1 // pred_check_branch
      %41 = sbr.rel (0) target = $region21
    $region20: #{forward.1} parent=1 // pred_region
      _
    $region21: #{forward.1} parent=1 // pred_fallthru
      _
    // Predicated region
    $region22: #{forward.1} parent=1 // pred_check
      _
    $region23: #{forward.1} parent=1 // pred_check_branch
      %43 = sbr.rel (0) target = $region25
    $region24: #{forward.1} parent=1 // pred_region
      %44 = dma.done [#allocation3], 20224
    $region25: #{forward.1} parent=1 // pred_fallthru
      _
    // Predicated region
    $region26: #{forward.1} parent=1 // pred_check
      _
    $region27: #{forward.1} parent=1 // pred_check_branch
      %46 = sbr.rel (0) target = $region29
    $region28: #{forward.1} parent=1 // pred_region
      %47 = dma.done [#allocation5], 16896
    $region29: #{forward.1} parent=1 // pred_fallthru
      _
    %v48 = vld [vmem:[%s0] sm:$0xff]
    %v49 = vld [vmem:[#allocation2] sm:$0xff]
    %v50 = vld [vmem:[#allocation2 + $0x8] sm:$0xff]
    %v51 = vld [vmem:[#allocation2 + $0x10] sm:$0xff]
    %v52 = vld [vmem:[#allocation2 + $0x18] sm:$0xff]
    %v53 = vld [vmem:[#allocation2 + $0x20] sm:$0xff]
    %v54 = vld [vmem:[#allocation2 + $0x28] sm:$0xff]
    %v55 = vld [vmem:[#allocation2 + $0x30] sm:$0xff]
    %v56 = vld [vmem:[#allocation2 + $0x38] sm:$0xff]
    %v57 = vld [vmem:[#allocation2 + $0x40] sm:$0xff]
    %v58 = vld [vmem:[#allocation2 + $0x48] sm:$0xff]
    %v59 = vld [vmem:[#allocation2 + $0x50] sm:$0xff]
    %v60 = vld [vmem:[#allocation2 + $0x58] sm:$0xff]
    %v61 = vld [vmem:[#allocation2 + $0x60] sm:$0xff]
    %v62 = vld [vmem:[#allocation2 + $0x68] sm:$0xff]
    %v63 = vld [vmem:[#allocation2 + $0x70] sm:$0xff]
    %v64 = vld [vmem:[#allocation2 + $0x78] sm:$0xff]
    %v65 = vld [vmem:[#allocation2 + $0x80] sm:$0xff]
    %v66 = vld [vmem:[#allocation2 + $0x88] sm:$0xff]
    %v67 = vld [vmem:[#allocation2 + $0x90] sm:$0xff]
    %v68 = vld [vmem:[#allocation2 + $0x98] sm:$0xff]
    %v69 = vld [vmem:[#allocation2 + $0xa0] sm:$0xff]
    %v70 = vld [vmem:[#allocation2 + $0xa8] sm:$0xff]
    %v71 = vld [vmem:[#allocation2 + $0xb0] sm:$0xff]
    %v72 = vld [vmem:[#allocation2 + $0xb8] sm:$0xff]
    %v73 = vld [vmem:[#allocation2 + $0xc0] sm:$0xff]
    %v74 = vld [vmem:[#allocation2 + $0xc8] sm:$0xff]
    %v75 = vld [vmem:[#allocation2 + $0xd0] sm:$0xff]
    %v76 = vld [vmem:[#allocation2 + $0xd8] sm:$0xff]
    %v77 = vld [vmem:[#allocation2 + $0xe0] sm:$0xff]
    %v78 = vld [vmem:[#allocation2 + $0xe8] sm:$0xff]
    %v79 = vld [vmem:[#allocation2 + $0xf0] sm:$0xff]
    %v80 = vld [vmem:[#allocation2 + $0xf8] sm:$0xff]
    %v81 = vld [vmem:[#allocation2 + $0x100] sm:$0xff]
    %v82 = vld [vmem:[#allocation2 + $0x108] sm:$0xff]
    %v83 = vld [vmem:[#allocation2 + $0x110] sm:$0xff]
    %v84 = vld [vmem:[#allocation2 + $0x118] sm:$0xff]
    %v85 = vld [vmem:[#allocation2 + $0x120] sm:$0xff]
    %v86 = vld [vmem:[#allocation2 + $0x128] sm:$0xff]
    %v87 = vld [vmem:[#allocation2 + $0x130] sm:$0xff]
    %v88 = vld [vmem:[#allocation2 + $0x138] sm:$0xff]
    %v89 = vld [vmem:[#allocation2 + $0x140] sm:$0xff]
    %v90 = vld [vmem:[#allocation2 + $0x148] sm:$0xff]
    %v91 = vld [vmem:[#allocation2 + $0x150] sm:$0xff]
    %v92 = vld [vmem:[#allocation2 + $0x158] sm:$0xff]
    %v93 = vld [vmem:[#allocation2 + $0x160] sm:$0xff]
    %v94 = vld [vmem:[#allocation2 + $0x168] sm:$0xff]
    %v95 = vld [vmem:[#allocation2 + $0x170] sm:$0xff]
    %v96 = vld [vmem:[#allocation2 + $0x178] sm:$0xff]
    %v97 = vld [vmem:[#allocation2 + $0x180] sm:$0xff]
    %v98 = vld [vmem:[#allocation2 + $0x188] sm:$0xff]
    %v99 = vld [vmem:[#allocation2 + $0x190] sm:$0xff]
    %v100 = vld [vmem:[#allocation2 + $0x198] sm:$0xff]
    %v101 = vld [vmem:[#allocation2 + $0x1a0] sm:$0xff]
    %v102 = vld [vmem:[#allocation2 + $0x1a8] sm:$0xff]
    %v103 = vld [vmem:[#allocation2 + $0x1b0] sm:$0xff]
    %v104 = vld [vmem:[#allocation2 + $0x1b8] sm:$0xff]
    %v105 = vld [vmem:[#allocation2 + $0x1c0] sm:$0xff]
    %v106 = vld [vmem:[#allocation2 + $0x1c8] sm:$0xff]
    %v107 = vld [vmem:[#allocation2 + $0x1d0] sm:$0xff]
    %v108 = vld [vmem:[#allocation2 + $0x1d8] sm:$0xff]
    %v109 = vld [vmem:[#allocation2 + $0x1e0] sm:$0xff]
    %v110 = vld [vmem:[#allocation2 + $0x1e8] sm:$0xff]
    %v111 = vld [vmem:[#allocation2 + $0x1f0] sm:$0xff]
    %v112 = vld [vmem:[#allocation2 + $0x1f8] sm:$0xff]
    %v113 = vld [vmem:[#allocation2 + $0x200] sm:$0xff]
    %v114 = vld [vmem:[#allocation2 + $0x208] sm:$0xff]
    %v115 = vld [vmem:[#allocation2 + $0x210] sm:$0xff]
    %v116 = vld [vmem:[#allocation2 + $0x218] sm:$0xff]
    %v117 = vld [vmem:[#allocation2 + $0x220] sm:$0xff]
    %v118 = vld [vmem:[#allocation2 + $0x228] sm:$0xff]
    %v119 = vld [vmem:[#allocation2 + $0x230] sm:$0xff]
    %v120 = vld [vmem:[#allocation2 + $0x238] sm:$0xff]
    %v121 = vld [vmem:[#allocation2 + $0x240] sm:$0xff]
    %v122 = vld [vmem:[#allocation2 + $0x248] sm:$0xff]
    %v123 = vld [vmem:[#allocation2 + $0x250] sm:$0xff]
    %v124 = vld [vmem:[#allocation2 + $0x258] sm:$0xff]
    %v125 = vld [vmem:[#allocation2 + $0x260] sm:$0xff]
    %v126 = vld [vmem:[#allocation2 + $0x268] sm:$0xff]
    %v127 = vld [vmem:[#allocation2 + $0x270] sm:$0xff]
    %v128 = vld [vmem:[#allocation2 + $0x278] sm:$0xff]
    %v129 = vld [vmem:[#allocation2 + $0x280] sm:$0xff]
    %v130 = vld [vmem:[#allocation2 + $0x288] sm:$0xff]
    %v131 = vld [vmem:[#allocation2 + $0x290] sm:$0xff]
    %v132 = vld [vmem:[#allocation2 + $0x298] sm:$0xff]
    %v133 = vld [vmem:[#allocation2 + $0x2a0] sm:$0xff]
    %v134 = vld [vmem:[#allocation2 + $0x2a8] sm:$0xff]
    %v135 = vld [vmem:[#allocation2 + $0x2b0] sm:$0xff]
    %v136 = vld [vmem:[#allocation2 + $0x2b8] sm:$0xff]
    %v137 = vld [vmem:[#allocation2 + $0x2c0] sm:$0xff]
    %v138 = vld [vmem:[#allocation2 + $0x2c8] sm:$0xff]
    %v139 = vld [vmem:[#allocation2 + $0x2d0] sm:$0xff]
    %v140 = vld [vmem:[#allocation2 + $0x2d8] sm:$0xff]
    %v141 = vld [vmem:[#allocation2 + $0x2e0] sm:$0xff]
    %v142 = vld [vmem:[#allocation2 + $0x2e8] sm:$0xff]
    %v143 = vld [vmem:[#allocation2 + $0x2f0] sm:$0xff]
    %v144 = vld [vmem:[#allocation2 + $0x2f8] sm:$0xff]
    %v145 = vld [vmem:[#allocation2 + $0x300] sm:$0xff]
    %v146 = vld [vmem:[#allocation2 + $0x308] sm:$0xff]
    %v147 = vld [vmem:[#allocation2 + $0x310] sm:$0xff]
    %v148 = vld [vmem:[#allocation2 + $0x318] sm:$0xff]
    %v149 = vld [vmem:[#allocation2 + $0x320] sm:$0xff]
    %v150 = vld [vmem:[#allocation2 + $0x328] sm:$0xff]
    %v151 = vld [vmem:[#allocation2 + $0x330] sm:$0xff]
    %v152 = vld [vmem:[#allocation2 + $0x338] sm:$0xff]
    %v153 = vld [vmem:[#allocation2 + $0x340] sm:$0xff]
    %v154 = vld [vmem:[#allocation2 + $0x348] sm:$0xff]
    %v155 = vld [vmem:[#allocation2 + $0x350] sm:$0xff]
    %v156 = vld [vmem:[#allocation2 + $0x358] sm:$0xff]
    %v157 = vld [vmem:[#allocation2 + $0x360] sm:$0xff]
    %v158 = vld [vmem:[#allocation2 + $0x368] sm:$0xff]
    %v159 = vld [vmem:[#allocation2 + $0x370] sm:$0xff]
    %v160 = vld [vmem:[#allocation2 + $0x378] sm:$0xff]
    %v161 = vld [vmem:[#allocation2 + $0x380] sm:$0xff]
    %v162 = vld [vmem:[#allocation2 + $0x388] sm:$0xff]
    %v163 = vld [vmem:[#allocation2 + $0x390] sm:$0xff]
    %v164 = vld [vmem:[#allocation2 + $0x398] sm:$0xff]
    %v165 = vld [vmem:[#allocation2 + $0x3a0] sm:$0xff]
    %v166 = vld [vmem:[#allocation2 + $0x3a8] sm:$0xff]
    %v167 = vld [vmem:[#allocation2 + $0x3b0] sm:$0xff]
    %v168 = vld [vmem:[#allocation2 + $0x3b8] sm:$0xff]
    %v170 = vcombine.high %v48, %v48
    %v172 = vunpack.c.l.s4 1983009808
    %v173 = vunpack.c.0.s8 %v172
    %v174 = vlaneseq
    %v175 = vshrl.u32 %v174, 7
    %v176 = vsub.s32 %v173, %v175
    %v177 = vrot.slane %v48, %v176
    %v179 = vunpack.c.l.s4 1983009808
    %v180 = vunpack.c.0.s8 %v179
    %v181 = vlaneseq
    %v182 = vshrl.u32 %v181, 7
    %v183 = vsub.s32 %v180, %v182
    %v184 = vrot.slane %v170, %v183
    %v185 = vcombine.high %v177, %v177
    %v186 = vcombine.high %v184, %v184
    %vm190 = vcmask 785408
    %v191 = vsel %vm190, %v186, 0
    %193 = vmatprep.subr.mxu0 %v50
    %194 = vmatpush1.msra.mxu0 %v49
    %195 = vmatprep.subr.mxu0 %v52
    %196 = vmatpush1.msra.mxu0 %v51
    %197 = vmatprep.subr.mxu0 %v54
    %198 = vmatpush1.msra.mxu0 %v53
    %199 = vmatprep.subr.mxu0 %v56
    %200 = vmatpush1.msra.mxu0 %v55
    %201 = vmatprep.subr.mxu0 %v58
    %202 = vmatpush1.msra.mxu0 %v57
    %203 = vmatprep.subr.mxu0 %v60
    %204 = vmatpush1.msra.mxu0 %v59
    %205 = vmatprep.subr.mxu0 %v62
    %206 = vmatpush1.msra.mxu0 %v61
    %207 = vmatprep.subr.mxu0 %v64
    %208 = vmatpush1.msra.mxu0 %v63
    %209 = vmatprep.subr.mxu0 %v66
    %210 = vmatpush1.msra.mxu0 %v65
    %211 = vmatprep.subr.mxu0 %v68
    %212 = vmatpush1.msra.mxu0 %v67
    %213 = vmatprep.subr.mxu0 %v70
    %214 = vmatpush1.msra.mxu0 %v69
    %215 = vmatprep.subr.mxu0 %v72
    %216 = vmatpush1.msra.mxu0 %v71
    %217 = vmatprep.subr.mxu0 %v74
    %218 = vmatpush1.msra.mxu0 %v73
    %219 = vmatprep.subr.mxu0 %v76
    %220 = vmatpush1.msra.mxu0 %v75
    %221 = vmatprep.subr.mxu0 %v78
    %222 = vmatpush1.msra.mxu0 %v77
    %223 = vmatprep.subr.mxu0 %v80
    %224 = vmatpush1.msra.mxu0 %v79
    %225 = vmatprep.subr.mxu0 %v82
    %226 = vmatpush1.msra.mxu0 %v81
    %227 = vmatprep.subr.mxu0 %v84
    %228 = vmatpush1.msra.mxu0 %v83
    %229 = vmatprep.subr.mxu0 %v86
    %230 = vmatpush1.msra.mxu0 %v85
    %231 = vmatprep.subr.mxu0 %v88
    %232 = vmatpush1.msra.mxu0 %v87
    %233 = vmatprep.subr.mxu0 %v90
    %234 = vmatpush1.msra.mxu0 %v89
    %235 = vmatprep.subr.mxu0 %v92
    %236 = vmatpush1.msra.mxu0 %v91
    %237 = vmatprep.subr.mxu0 %v94
    %238 = vmatpush1.msra.mxu0 %v93
    %239 = vmatprep.subr.mxu0 %v96
    %240 = vmatpush1.msra.mxu0 %v95
    %241 = vmatprep.subr.mxu0 %v98
    %242 = vmatpush1.msra.mxu0 %v97
    %243 = vmatprep.subr.mxu0 %v100
    %244 = vmatpush1.msra.mxu0 %v99
    %245 = vmatprep.subr.mxu0 %v102
    %246 = vmatpush1.msra.mxu0 %v101
    %247 = vmatprep.subr.mxu0 %v104
    %248 = vmatpush1.msra.mxu0 %v103
    %249 = vmatprep.subr.mxu0 %v106
    %250 = vmatpush1.msra.mxu0 %v105
    %251 = vmatprep.subr.mxu0 %v108
    %252 = vmatpush1.msra.mxu0 %v107
    %253 = vmatprep.subr.mxu0 %v110
    %254 = vmatpush1.msra.mxu0 %v109
    %255 = vmatprep.subr.mxu0 %v112
    %256 = vmatpush1.msra.mxu0 %v111
    %257 = vmatprep.mubr.f32.mxu0 %v185
    %258 = vmatmul.mubr.f32.gmra.mrb[0].mxu0 %v177
    %v259 = vpop.f32.mrb[0].mxu0
    %v260 = vadd.f32 0.0, %v259
    %v261 = vpop.f32.mrb[0].mxu0
    %v262 = vadd.f32 0.0, %v261
    %263 = vdwg.mxu0
    %264 = vmatprep.subr.mxu0 %v114
    %265 = vmatpush1.msra.mxu0 %v113
    %266 = vmatprep.subr.mxu0 %v116
    %267 = vmatpush1.msra.mxu0 %v115
    %268 = vmatprep.subr.mxu0 %v118
    %269 = vmatpush1.msra.mxu0 %v117
    %270 = vmatprep.subr.mxu0 %v120
    %271 = vmatpush1.msra.mxu0 %v119
    %272 = vmatprep.subr.mxu0 %v122
    %273 = vmatpush1.msra.mxu0 %v121
    %274 = vmatprep.subr.mxu0 %v124
    %275 = vmatpush1.msra.mxu0 %v123
    %276 = vmatprep.subr.mxu0 %v126
    %277 = vmatpush1.msra.mxu0 %v125
    %278 = vmatprep.subr.mxu0 %v128
    %279 = vmatpush1.msra.mxu0 %v127
    %280 = vmatprep.subr.mxu0 %v130
    %281 = vmatpush1.msra.mxu0 %v129
    %282 = vmatprep.subr.mxu0 %v132
    %283 = vmatpush1.msra.mxu0 %v131
    %284 = vmatprep.subr.mxu0 %v134
    %285 = vmatpush1.msra.mxu0 %v133
    %286 = vmatprep.subr.mxu0 %v136
    %287 = vmatpush1.msra.mxu0 %v135
    %288 = vmatprep.subr.mxu0 %v138
    %289 = vmatpush1.msra.mxu0 %v137
    %290 = vmatprep.subr.mxu0 %v140
    %291 = vmatpush1.msra.mxu0 %v139
    %292 = vmatprep.subr.mxu0 %v142
    %293 = vmatpush1.msra.mxu0 %v141
    %294 = vmatprep.subr.mxu0 %v144
    %295 = vmatpush1.msra.mxu0 %v143
    %296 = vmatprep.subr.mxu0 %v146
    %297 = vmatpush1.msra.mxu0 %v145
    %298 = vmatprep.subr.mxu0 %v148
    %299 = vmatpush1.msra.mxu0 %v147
    %300 = vmatprep.subr.mxu0 %v150
    %301 = vmatpush1.msra.mxu0 %v149
    %302 = vmatprep.subr.mxu0 %v152
    %303 = vmatpush1.msra.mxu0 %v151
    %304 = vmatprep.subr.mxu0 %v154
    %305 = vmatpush1.msra.mxu0 %v153
    %306 = vmatprep.subr.mxu0 %v156
    %307 = vmatpush1.msra.mxu0 %v155
    %308 = vmatprep.subr.mxu0 %v158
    %309 = vmatpush1.msra.mxu0 %v157
    %310 = vmatprep.subr.mxu0 %v160
    %311 = vmatpush1.msra.mxu0 %v159
    %312 = vmatprep.subr.mxu0 %v162
    %313 = vmatpush1.msra.mxu0 %v161
    %314 = vmatprep.subr.mxu0 %v164
    %315 = vmatpush1.msra.mxu0 %v163
    %316 = vmatprep.subr.mxu0 %v166
    %317 = vmatpush1.msra.mxu0 %v165
    %318 = vmatprep.subr.mxu0 %v168
    %319 = vmatpush1.msra.mxu0 %v167
    %320 = vmatprep.subr.mxu0 0.0
    %321 = vmatpush1.msra.mxu0 0.0
    %322 = vmatprep.subr.mxu0 0.0
    %323 = vmatpush1.msra.mxu0 0.0
    %324 = vmatprep.subr.mxu0 0.0
    %325 = vmatpush1.msra.mxu0 0.0
    %326 = vmatprep.subr.mxu0 0.0
    %327 = vmatpush1.msra.mxu0 0.0
    %328 = vmatprep.mubr.f32.mxu0 %v191
    %329 = vmatmul.mubr.f32.gmra.mrb[0].mxu0 %v184
    %v330 = vpop.f32.mrb[0].mxu0
    %v331 = vadd.f32 %v260, %v330
    %v332 = vpop.f32.mrb[0].mxu0
    %v333 = vadd.f32 %v262, %v332
    %334 = vdwg.mxu0
    %v335 = vld [vmem:[%s4] sm:$0xff]
    %v336 = vld [vmem:[%s4 + $0x8] sm:$0xff]
    %v337 = vld [vmem:[%s4 + $0x10] sm:$0xff]
    %v338 = vld [vmem:[%s4 + $0x18] sm:$0xff]
    %v339 = vld [vmem:[%s4 + $0x20] sm:$0xff]
    %v340 = vld [vmem:[%s4 + $0x28] sm:$0xff]
    %v341 = vld [vmem:[%s4 + $0x30] sm:$0xff]
    %v342 = vld [vmem:[%s4 + $0x38] sm:$0xff]
    %v343 = vld [vmem:[%s4 + $0x40] sm:$0xff]
    %v344 = vld [vmem:[%s4 + $0x48] sm:$0xff]
    %v345 = vld [vmem:[%s4 + $0x50] sm:$0xff]
    %v346 = vld [vmem:[%s4 + $0x58] sm:$0xff]
    %v347 = vld [vmem:[%s4 + $0x60] sm:$0xff]
    %v348 = vld [vmem:[%s4 + $0x68] sm:$0xff]
    %v349 = vld [vmem:[%s4 + $0x70] sm:$0xff]
    %v350 = vld [vmem:[%s4 + $0x78] sm:$0xff]
    %v351 = vld [vmem:[%s4 + $0x80] sm:$0xff]
    %v352 = vld [vmem:[%s4 + $0x88] sm:$0xff]
    %v353 = vld [vmem:[%s4 + $0x90] sm:$0xff]
    %v354 = vld [vmem:[%s4 + $0x98] sm:$0xff]
    %v355 = vld [vmem:[%s4 + $0xa0] sm:$0xff]
    %v356 = vld [vmem:[%s4 + $0xa8] sm:$0xff]
    %v357 = vld [vmem:[%s4 + $0xb0] sm:$0xff]
    %v358 = vld [vmem:[%s4 + $0xb8] sm:$0xff]
    %v359 = vld [vmem:[%s4 + $0xc0] sm:$0xff]
    %v360 = vld [vmem:[%s4 + $0xc8] sm:$0xff]
    %v361 = vld [vmem:[%s4 + $0xd0] sm:$0xff]
    %v362 = vld [vmem:[%s4 + $0xd8] sm:$0xff]
    %v363 = vld [vmem:[%s4 + $0xe0] sm:$0xff]
    %v364 = vld [vmem:[%s4 + $0xe8] sm:$0xff]
    %v365 = vld [vmem:[%s4 + $0xf0] sm:$0xff]
    %v366 = vld [vmem:[%s4 + $0xf8] sm:$0xff]
    %v367 = vld [vmem:[#allocation2 + $0x4c0] sm:$0xff]
    %v368 = vld [vmem:[#allocation2 + $0x4c8] sm:$0xff]
    %vm369 = vcmask 1041408
    %v370 = vsel %vm369, %v331, 0.0
    %v371 = vrot.slane %v370, 4
    %v372 = vadd.f32 %v370, %v371
    %v373 = vrot.slane %v372, 2
    %v374 = vadd.f32 %v372, %v373
    %v375 = vrot.slane %v374, 1
    %v376 = vadd.f32 %v374, %v375
    %v377 = vsel %vm369, %v333, 0.0
    %v378 = vrot.slane %v377, 4
    %v379 = vadd.f32 %v377, %v378
    %v380 = vrot.slane %v379, 2
    %v381 = vadd.f32 %v379, %v380
    %v382 = vrot.slane %v381, 1
    %v383 = vadd.f32 %v381, %v382
    %v384 = vmul.f32 %v331, %v331
    %v385 = vmul.f32 %v333, %v333
    %v386 = vsel %vm369, %v384, 0.0
    %v387 = vrot.slane %v386, 4
    %v388 = vadd.f32 %v386, %v387
    %v389 = vrot.slane %v388, 2
    %v390 = vadd.f32 %v388, %v389
    %v391 = vrot.slane %v390, 1
    %v392 = vadd.f32 %v390, %v391
    %v393 = vsel %vm369, %v385, 0.0
    %v394 = vrot.slane %v393, 4
    %v395 = vadd.f32 %v393, %v394
    %v396 = vrot.slane %v395, 2
    %v397 = vadd.f32 %v395, %v396
    %v398 = vrot.slane %v397, 1
    %v399 = vadd.f32 %v397, %v398
    %v400 = vlaneseq
    %v401 = vshrl.u32 %v400, 7
    %vm402 = vcmp.eq.s32.totalorder %v401, 0
    %v403 = vsel %vm402, %v376, %v392
    %v404 = vsel %vm402, %v383, %v399
    %405 = vmatprep.subr.mxu0 0.0
    %406 = vmatpush1.msra.mxu0 %v335
    %407 = vmatprep.subr.mxu0 0.0
    %408 = vmatpush1.msra.mxu0 %v336
    %409 = vmatprep.subr.mxu0 0.0
    %410 = vmatpush1.msra.mxu0 %v337
    %411 = vmatprep.subr.mxu0 0.0
    %412 = vmatpush1.msra.mxu0 %v338
    %413 = vmatprep.subr.mxu0 0.0
    %414 = vmatpush1.msra.mxu0 %v339
    %415 = vmatprep.subr.mxu0 0.0
    %416 = vmatpush1.msra.mxu0 %v340
    %417 = vmatprep.subr.mxu0 0.0
    %418 = vmatpush1.msra.mxu0 %v341
    %419 = vmatprep.subr.mxu0 0.0
    %420 = vmatpush1.msra.mxu0 %v342
    %421 = vmatprep.subr.mxu0 0.0
    %422 = vmatpush1.msra.mxu0 %v343
    %423 = vmatprep.subr.mxu0 0.0
    %424 = vmatpush1.msra.mxu0 %v344
    %425 = vmatprep.subr.mxu0 0.0
    %426 = vmatpush1.msra.mxu0 %v345
    %427 = vmatprep.subr.mxu0 0.0
    %428 = vmatpush1.msra.mxu0 %v346
    %429 = vmatprep.subr.mxu0 0.0
    %430 = vmatpush1.msra.mxu0 %v347
    %431 = vmatprep.subr.mxu0 0.0
    %432 = vmatpush1.msra.mxu0 %v348
    %433 = vmatprep.subr.mxu0 0.0
    %434 = vmatpush1.msra.mxu0 %v349
    %435 = vmatprep.subr.mxu0 0.0
    %436 = vmatpush1.msra.mxu0 %v350
    %437 = vmatprep.subr.mxu0 0.0
    %438 = vmatpush1.msra.mxu0 %v351
    %439 = vmatprep.subr.mxu0 0.0
    %440 = vmatpush1.msra.mxu0 %v352
    %441 = vmatprep.subr.mxu0 0.0
    %442 = vmatpush1.msra.mxu0 %v353
    %443 = vmatprep.subr.mxu0 0.0
    %444 = vmatpush1.msra.mxu0 %v354
    %445 = vmatprep.subr.mxu0 0.0
    %446 = vmatpush1.msra.mxu0 %v355
    %447 = vmatprep.subr.mxu0 0.0
    %448 = vmatpush1.msra.mxu0 %v356
    %449 = vmatprep.subr.mxu0 0.0
    %450 = vmatpush1.msra.mxu0 %v357
    %451 = vmatprep.subr.mxu0 0.0
    %452 = vmatpush1.msra.mxu0 %v358
    %453 = vmatprep.subr.mxu0 0.0
    %454 = vmatpush1.msra.mxu0 %v359
    %455 = vmatprep.subr.mxu0 0.0
    %456 = vmatpush1.msra.mxu0 %v360
    %457 = vmatprep.subr.mxu0 0.0
    %458 = vmatpush1.msra.mxu0 %v361
    %459 = vmatprep.subr.mxu0 0.0
    %460 = vmatpush1.msra.mxu0 %v362
    %461 = vmatprep.subr.mxu0 0.0
    %462 = vmatpush1.msra.mxu0 %v363
    %463 = vmatprep.subr.mxu0 0.0
    %464 = vmatpush1.msra.mxu0 %v364
    %465 = vmatprep.subr.mxu0 0.0
    %466 = vmatpush1.msra.mxu0 %v365
    %467 = vmatprep.subr.mxu0 0.0
    %468 = vmatpush1.msra.mxu0 %v366
    %469 = vmatprep.mubr.f32.mxu0 %v404
    %470 = vmatmul.mubr.f32.gmra.mrb[0].mxu0 %v403
    %v471 = vpop.f32.mrb[0].mxu0
    %v472 = vadd.f32 0.0, %v471
    %v473 = vpop.f32.mrb[0].mxu0
    %474 = vdwg.mxu0
    %v475 = vmul.f32 %v472, %v472
    %v477 = vrot.slane %v475, 7
    %v479 = vsub.f32 %v472, %v477
    %v480 = vadd.f32 %v479, 1e-05
    %v481 = vrsqrt.pop %v480
    %v482 = vsub.f32 0.0, %v472
    %v484 = vrot.slane %v481, 1
    %v486 = vmul.f32 %v482, %v484
    %v487 = vlaneseq
    %v488 = vshrl.u32 %v487, 7
    %v489 = vsub.s32 1, %v488
    %v490 = vrot.slane %v481, %v489
    %v491 = vlaneseq
    %v492 = vshrl.u32 %v491, 7
    %v493 = vsub.s32 0, %v492
    %v494 = vrot.slane %v486, %v493
    %v495 = vsel %vm402, %v490, %v494
    %vm496 = vcmask 64512
    %v498 = vsel %vm496, %v495, 0
    %500 = vmatprep.subr.mxu0 %v368
    %501 = vmatpush1.msra.mxu0 %v367
    %502 = vmatprep.subr.mxu0 0.0
    %503 = vmatpush1.msra.mxu0 0.0
    %504 = vmatprep.subr.mxu0 0.0
    %505 = vmatpush1.msra.mxu0 0.0
    %506 = vmatprep.subr.mxu0 0.0
    %507 = vmatpush1.msra.mxu0 0.0
    %508 = vmatprep.subr.mxu0 0.0
    %509 = vmatpush1.msra.mxu0 0.0
    %510 = vmatprep.subr.mxu0 0.0
    %511 = vmatpush1.msra.mxu0 0.0
    %512 = vmatprep.subr.mxu0 0.0
    %513 = vmatpush1.msra.mxu0 0.0
    %514 = vmatprep.subr.mxu0 0.0
    %515 = vmatpush1.msra.mxu0 0.0
    %516 = vmatprep.subr.mxu0 0.0
    %517 = vmatpush1.msra.mxu0 0.0
    %518 = vmatprep.subr.mxu0 0.0
    %519 = vmatpush1.msra.mxu0 0.0
    %520 = vmatprep.subr.mxu0 0.0
    %521 = vmatpush1.msra.mxu0 0.0
    %522 = vmatprep.subr.mxu0 0.0
    %523 = vmatpush1.msra.mxu0 0.0
    %524 = vmatprep.subr.mxu0 0.0
    %525 = vmatpush1.msra.mxu0 0.0
    %526 = vmatprep.subr.mxu0 0.0
    %527 = vmatpush1.msra.mxu0 0.0
    %528 = vmatprep.subr.mxu0 0.0
    %529 = vmatpush1.msra.mxu0 0.0
    %530 = vmatprep.subr.mxu0 0.0
    %531 = vmatpush1.msra.mxu0 0.0
    %532 = vmatprep.subr.mxu0 0.0
    %533 = vmatpush1.msra.mxu0 0.0
    %534 = vmatprep.subr.mxu0 0.0
    %535 = vmatpush1.msra.mxu0 0.0
    %536 = vmatprep.subr.mxu0 0.0
    %537 = vmatpush1.msra.mxu0 0.0
    %538 = vmatprep.subr.mxu0 0.0
    %539 = vmatpush1.msra.mxu0 0.0
    %540 = vmatprep.subr.mxu0 0.0
    %541 = vmatpush1.msra.mxu0 0.0
    %542 = vmatprep.subr.mxu0 0.0
    %543 = vmatpush1.msra.mxu0 0.0
    %544 = vmatprep.subr.mxu0 0.0
    %545 = vmatpush1.msra.mxu0 0.0
    %546 = vmatprep.subr.mxu0 0.0
    %547 = vmatpush1.msra.mxu0 0.0
    %548 = vmatprep.subr.mxu0 0.0
    %549 = vmatpush1.msra.mxu0 0.0
    %550 = vmatprep.subr.mxu0 0.0
    %551 = vmatpush1.msra.mxu0 0.0
    %552 = vmatprep.subr.mxu0 0.0
    %553 = vmatpush1.msra.mxu0 0.0
    %554 = vmatprep.subr.mxu0 0.0
    %555 = vmatpush1.msra.mxu0 0.0
    %556 = vmatprep.subr.mxu0 0.0
    %557 = vmatpush1.msra.mxu0 0.0
    %558 = vmatprep.subr.mxu0 0.0
    %559 = vmatpush1.msra.mxu0 0.0
    %560 = vmatprep.subr.mxu0 0.0
    %561 = vmatpush1.msra.mxu0 0.0
    %562 = vmatprep.subr.mxu0 0.0
    %563 = vmatpush1.msra.mxu0 0.0
    %564 = vmatprep.mubr.f32.mxu0 0.0
    %565 = vmatmul.mubr.f32.gmra.mrb[0].mxu0 %v498
    %v566 = vpop.f32.mrb[0].mxu0
    %v567 = vadd.f32 0.0, %v566
    %v568 = vpop.f32.mrb[0].mxu0
    %v569 = vadd.f32 0.0, %v568
    %570 = vdwg.mxu0
    %v571 = vlaneseq
    %v572 = vshrl.u32 %v571, 7
    %v573 = vsub.s32 0, %v572
    %v574 = vrot.slane %v567, %v573
    %v575 = vlaneseq
    %v576 = vshrl.u32 %v575, 7
    %v577 = vsub.s32 0, %v576
    %v578 = vrot.slane %v569, %v577
    %v579 = vmul.f32 %v331, %v574
    %v580 = vmul.f32 %v333, %v578
    %v581 = vlaneseq
    %v582 = vshrl.u32 %v581, 7
    %v583 = vsub.s32 1, %v582
    %v584 = vrot.slane %v567, %v583
    %v585 = vlaneseq
    %v586 = vshrl.u32 %v585, 7
    %v587 = vsub.s32 1, %v586
    %v588 = vrot.slane %v569, %v587
    %v589 = vadd.f32 %v579, %v584
    %v590 = vadd.f32 %v580, %v588
    %vm591 = vcmp.ge.f32.partialorder %v589, 0.0
    %vm592 = vcmp.ge.f32.partialorder %v590, 0.0
    %v593 = vmul.f32 %v589, 0.01
    %v594 = vmul.f32 %v590, 0.01
    %v595 = vsel %vm591, %v589, %v593
    %v596 = vsel %vm592, %v590, %v594
    %v597 = vld [vmem:[%s2] sm:$0xff]
    %v598 = vld [vmem:[%s2 + $0x8] sm:$0xff]
    %v599 = vld [vmem:[%s2 + $0x10] sm:$0xff]
    %v600 = vld [vmem:[%s2 + $0x18] sm:$0xff]
    %v601 = vld [vmem:[%s2 + $0x20] sm:$0xff]
    %v602 = vld [vmem:[%s2 + $0x28] sm:$0xff]
    %v603 = vld [vmem:[%s2 + $0x30] sm:$0xff]
    %v604 = vld [vmem:[%s2 + $0x38] sm:$0xff]
    %v605 = vld [vmem:[%s2 + $0x40] sm:$0xff]
    %v606 = vld [vmem:[%s2 + $0x48] sm:$0xff]
    %v607 = vld [vmem:[%s2 + $0x50] sm:$0xff]
    %v608 = vld [vmem:[%s2 + $0x58] sm:$0xff]
    %v609 = vld [vmem:[%s2 + $0x60] sm:$0xff]
    %v610 = vld [vmem:[%s2 + $0x68] sm:$0xff]
    %v611 = vld [vmem:[%s2 + $0x70] sm:$0xff]
    %v612 = vld [vmem:[%s2 + $0x78] sm:$0xff]
    %v613 = vld [vmem:[%s2 + $0x80] sm:$0xff]
    %v614 = vld [vmem:[%s2 + $0x88] sm:$0xff]
    %v615 = vld [vmem:[%s2 + $0x90] sm:$0xff]
    %v616 = vld [vmem:[%s2 + $0x98] sm:$0xff]
    %v617 = vld [vmem:[%s2 + $0xa0] sm:$0xff]
    %v618 = vld [vmem:[%s2 + $0xa8] sm:$0xff]
    %v619 = vld [vmem:[%s2 + $0xb0] sm:$0xff]
    %v620 = vld [vmem:[%s2 + $0xb8] sm:$0xff]
    %v621 = vld [vmem:[%s2 + $0xc0] sm:$0xff]
    %v622 = vld [vmem:[%s2 + $0xc8] sm:$0xff]
    %v623 = vld [vmem:[%s2 + $0xd0] sm:$0xff]
    %v624 = vld [vmem:[%s2 + $0xd8] sm:$0xff]
    %v625 = vld [vmem:[%s2 + $0xe0] sm:$0xff]
    %v626 = vld [vmem:[%s2 + $0xe8] sm:$0xff]
    %v627 = vld [vmem:[%s2 + $0xf0] sm:$0xff]
    %v628 = vld [vmem:[%s2 + $0xf8] sm:$0xff]
    %629 = vmatprep.subr.mxu0 0.0
    %630 = vmatpush1.msra.mxu0 %v597
    %631 = vmatprep.subr.mxu0 0.0
    %632 = vmatpush1.msra.mxu0 %v598
    %633 = vmatprep.subr.mxu0 0.0
    %634 = vmatpush1.msra.mxu0 %v599
    %635 = vmatprep.subr.mxu0 0.0
    %636 = vmatpush1.msra.mxu0 %v600
    %637 = vmatprep.subr.mxu0 0.0
    %638 = vmatpush1.msra.mxu0 %v601
    %639 = vmatprep.subr.mxu0 0.0
    %640 = vmatpush1.msra.mxu0 %v602
    %641 = vmatprep.subr.mxu0 0.0
    %642 = vmatpush1.msra.mxu0 %v603
    %643 = vmatprep.subr.mxu0 0.0
    %644 = vmatpush1.msra.mxu0 %v604
    %645 = vmatprep.subr.mxu0 0.0
    %646 = vmatpush1.msra.mxu0 %v605
    %647 = vmatprep.subr.mxu0 0.0
    %648 = vmatpush1.msra.mxu0 %v606
    %649 = vmatprep.subr.mxu0 0.0
    %650 = vmatpush1.msra.mxu0 %v607
    %651 = vmatprep.subr.mxu0 0.0
    %652 = vmatpush1.msra.mxu0 %v608
    %653 = vmatprep.subr.mxu0 0.0
    %654 = vmatpush1.msra.mxu0 %v609
    %655 = vmatprep.subr.mxu0 0.0
    %656 = vmatpush1.msra.mxu0 %v610
    %657 = vmatprep.subr.mxu0 0.0
    %658 = vmatpush1.msra.mxu0 %v611
    %659 = vmatprep.subr.mxu0 0.0
    %660 = vmatpush1.msra.mxu0 %v612
    %661 = vmatprep.subr.mxu0 0.0
    %662 = vmatpush1.msra.mxu0 %v613
    %663 = vmatprep.subr.mxu0 0.0
    %664 = vmatpush1.msra.mxu0 %v614
    %665 = vmatprep.subr.mxu0 0.0
    %666 = vmatpush1.msra.mxu0 %v615
    %667 = vmatprep.subr.mxu0 0.0
    %668 = vmatpush1.msra.mxu0 %v616
    %669 = vmatprep.subr.mxu0 0.0
    %670 = vmatpush1.msra.mxu0 %v617
    %671 = vmatprep.subr.mxu0 0.0
    %672 = vmatpush1.msra.mxu0 %v618
    %673 = vmatprep.subr.mxu0 0.0
    %674 = vmatpush1.msra.mxu0 %v619
    %675 = vmatprep.subr.mxu0 0.0
    %676 = vmatpush1.msra.mxu0 %v620
    %677 = vmatprep.subr.mxu0 0.0
    %678 = vmatpush1.msra.mxu0 %v621
    %679 = vmatprep.subr.mxu0 0.0
    %680 = vmatpush1.msra.mxu0 %v622
    %681 = vmatprep.subr.mxu0 0.0
    %682 = vmatpush1.msra.mxu0 %v623
    %683 = vmatprep.subr.mxu0 0.0
    %684 = vmatpush1.msra.mxu0 %v624
    %685 = vmatprep.subr.mxu0 0.0
    %686 = vmatpush1.msra.mxu0 %v625
    %687 = vmatprep.subr.mxu0 0.0
    %688 = vmatpush1.msra.mxu0 %v626
    %689 = vmatprep.subr.mxu0 0.0
    %690 = vmatpush1.msra.mxu0 %v627
    %691 = vmatprep.subr.mxu0 0.0
    %692 = vmatpush1.msra.mxu0 %v628
    %693 = vmatprep.mubr.f32.mxu0 %v596
    %694 = vmatmul.mubr.f32.gmra.mrb[0].mxu0 %v595
    %v695 = vpop.f32.mrb[0].mxu0
    %v696 = vadd.f32 0.0, %v695
    %v697 = vpop.f32.mrb[0].mxu0
    %698 = vdwg.mxu0
    %v699 = vld [vmem:[%s4 + $0x100] sm:$0xff]
    %v700 = vld [vmem:[%s4 + $0x108] sm:$0xff]
    %v701 = vld [vmem:[%s4 + $0x110] sm:$0xff]
    %v702 = vld [vmem:[%s4 + $0x118] sm:$0xff]
    %v703 = vld [vmem:[%s4 + $0x120] sm:$0xff]
    %v704 = vld [vmem:[%s4 + $0x128] sm:$0xff]
    %v705 = vld [vmem:[%s4 + $0x130] sm:$0xff]
    %v706 = vld [vmem:[%s4 + $0x138] sm:$0xff]
    %v707 = vld [vmem:[%s4 + $0x140] sm:$0xff]
    %v708 = vld [vmem:[%s4 + $0x148] sm:$0xff]
    %v709 = vld [vmem:[%s4 + $0x150] sm:$0xff]
    %v710 = vld [vmem:[%s4 + $0x158] sm:$0xff]
    %v711 = vld [vmem:[%s4 + $0x160] sm:$0xff]
    %v712 = vld [vmem:[%s4 + $0x168] sm:$0xff]
    %v713 = vld [vmem:[%s4 + $0x170] sm:$0xff]
    %v714 = vld [vmem:[%s4 + $0x178] sm:$0xff]
    %v715 = vld [vmem:[%s2 + $0x100] sm:$0xff]
    %v716 = vsel %vm369, %v696, 0.0
    %v717 = vrot.slane %v716, 4
    %v718 = vadd.f32 %v716, %v717
    %v719 = vrot.slane %v718, 2
    %v720 = vadd.f32 %v718, %v719
    %v721 = vrot.slane %v720, 1
    %v722 = vadd.f32 %v720, %v721
    %v723 = vmul.f32 %v696, %v696
    %v724 = vsel %vm369, %v723, 0.0
    %v725 = vrot.slane %v724, 4
    %v726 = vadd.f32 %v724, %v725
    %v727 = vrot.slane %v726, 2
    %v728 = vadd.f32 %v726, %v727
    %v729 = vrot.slane %v728, 1
    %v730 = vadd.f32 %v728, %v729
    %v731 = vsel %vm402, %v722, %v730
    %732 = vmatprep.subr.mxu0 0.0
    %733 = vmatpush1.msra.mxu0 %v699
    %734 = vmatprep.subr.mxu0 0.0
    %735 = vmatpush1.msra.mxu0 %v700
    %736 = vmatprep.subr.mxu0 0.0
    %737 = vmatpush1.msra.mxu0 %v701
    %738 = vmatprep.subr.mxu0 0.0
    %739 = vmatpush1.msra.mxu0 %v702
    %740 = vmatprep.subr.mxu0 0.0
    %741 = vmatpush1.msra.mxu0 %v703
    %742 = vmatprep.subr.mxu0 0.0
    %743 = vmatpush1.msra.mxu0 %v704
    %744 = vmatprep.subr.mxu0 0.0
    %745 = vmatpush1.msra.mxu0 %v705
    %746 = vmatprep.subr.mxu0 0.0
    %747 = vmatpush1.msra.mxu0 %v706
    %748 = vmatprep.subr.mxu0 0.0
    %749 = vmatpush1.msra.mxu0 %v707
    %750 = vmatprep.subr.mxu0 0.0
    %751 = vmatpush1.msra.mxu0 %v708
    %752 = vmatprep.subr.mxu0 0.0
    %753 = vmatpush1.msra.mxu0 %v709
    %754 = vmatprep.subr.mxu0 0.0
    %755 = vmatpush1.msra.mxu0 %v710
    %756 = vmatprep.subr.mxu0 0.0
    %757 = vmatpush1.msra.mxu0 %v711
    %758 = vmatprep.subr.mxu0 0.0
    %759 = vmatpush1.msra.mxu0 %v712
    %760 = vmatprep.subr.mxu0 0.0
    %761 = vmatpush1.msra.mxu0 %v713
    %762 = vmatprep.subr.mxu0 0.0
    %763 = vmatpush1.msra.mxu0 %v714
    %764 = vmatprep.subr.mxu0 0.0
    %765 = vmatpush1.msra.mxu0 0.0
    %766 = vmatprep.subr.mxu0 0.0
    %767 = vmatpush1.msra.mxu0 0.0
    %768 = vmatprep.subr.mxu0 0.0
    %769 = vmatpush1.msra.mxu0 0.0
    %770 = vmatprep.subr.mxu0 0.0
    %771 = vmatpush1.msra.mxu0 0.0
    %772 = vmatprep.subr.mxu0 0.0
    %773 = vmatpush1.msra.mxu0 0.0
    %774 = vmatprep.subr.mxu0 0.0
    %775 = vmatpush1.msra.mxu0 0.0
    %776 = vmatprep.subr.mxu0 0.0
    %777 = vmatpush1.msra.mxu0 0.0
    %778 = vmatprep.subr.mxu0 0.0
    %779 = vmatpush1.msra.mxu0 0.0
    %780 = vmatprep.subr.mxu0 0.0
    %781 = vmatpush1.msra.mxu0 0.0
    %782 = vmatprep.subr.mxu0 0.0
    %783 = vmatpush1.msra.mxu0 0.0
    %784 = vmatprep.subr.mxu0 0.0
    %785 = vmatpush1.msra.mxu0 0.0
    %786 = vmatprep.subr.mxu0 0.0
    %787 = vmatpush1.msra.mxu0 0.0
    %788 = vmatprep.subr.mxu0 0.0
    %789 = vmatpush1.msra.mxu0 0.0
    %790 = vmatprep.subr.mxu0 0.0
    %791 = vmatpush1.msra.mxu0 0.0
    %792 = vmatprep.subr.mxu0 0.0
    %793 = vmatpush1.msra.mxu0 0.0
    %794 = vmatprep.subr.mxu0 0.0
    %795 = vmatpush1.msra.mxu0 0.0
    %796 = vmatprep.mubr.f32.mxu0 0.0
    %797 = vmatmul.mubr.f32.gmra.mrb[0].mxu0 %v731
    %v798 = vpop.f32.mrb[0].mxu0
    %v799 = vadd.f32 0.0, %v798
    %v800 = vpop.f32.mrb[0].mxu0
    %801 = vdwg.mxu0
    %v802 = vmul.f32 %v799, %v799
    %v804 = vrot.slane %v802, 7
    %v806 = vsub.f32 %v799, %v804
    %v807 = vadd.f32 %v806, 1e-05
    %v808 = vrsqrt.pop %v807
    %v809 = vsub.f32 0.0, %v799
    %v811 = vrot.slane %v808, 1
    %v813 = vmul.f32 %v809, %v811
    %v814 = vlaneseq
    %v815 = vshrl.u32 %v814, 7
    %v816 = vsub.s32 1, %v815
    %v817 = vrot.slane %v808, %v816
    %v818 = vlaneseq
    %v819 = vshrl.u32 %v818, 7
    %v820 = vsub.s32 0, %v819
    %v821 = vrot.slane %v813, %v820
    %v822 = vsel %vm402, %v817, %v821
    %v824 = vsel %vm496, %v822, 0
    %826 = vmatprep.subr.mxu0 0.0
    %827 = vmatpush1.msra.mxu0 %v715
    %828 = vmatprep.subr.mxu0 0.0
    %829 = vmatpush1.msra.mxu0 0.0
    %830 = vmatprep.subr.mxu0 0.0
    %831 = vmatpush1.msra.mxu0 0.0
    %832 = vmatprep.subr.mxu0 0.0
    %833 = vmatpush1.msra.mxu0 0.0
    %834 = vmatprep.subr.mxu0 0.0
    %835 = vmatpush1.msra.mxu0 0.0
    %836 = vmatprep.subr.mxu0 0.0
    %837 = vmatpush1.msra.mxu0 0.0
    %838 = vmatprep.subr.mxu0 0.0
    %839 = vmatpush1.msra.mxu0 0.0
    %840 = vmatprep.subr.mxu0 0.0
    %841 = vmatpush1.msra.mxu0 0.0
    %842 = vmatprep.subr.mxu0 0.0
    %843 = vmatpush1.msra.mxu0 0.0
    %844 = vmatprep.subr.mxu0 0.0
    %845 = vmatpush1.msra.mxu0 0.0
    %846 = vmatprep.subr.mxu0 0.0
    %847 = vmatpush1.msra.mxu0 0.0
    %848 = vmatprep.subr.mxu0 0.0
    %849 = vmatpush1.msra.mxu0 0.0
    %850 = vmatprep.subr.mxu0 0.0
    %851 = vmatpush1.msra.mxu0 0.0
    %852 = vmatprep.subr.mxu0 0.0
    %853 = vmatpush1.msra.mxu0 0.0
    %854 = vmatprep.subr.mxu0 0.0
    %855 = vmatpush1.msra.mxu0 0.0
    %856 = vmatprep.subr.mxu0 0.0
    %857 = vmatpush1.msra.mxu0 0.0
    %858 = vmatprep.subr.mxu0 0.0
    %859 = vmatpush1.msra.mxu0 0.0
    %860 = vmatprep.subr.mxu0 0.0
    %861 = vmatpush1.msra.mxu0 0.0
    %862 = vmatprep.subr.mxu0 0.0
    %863 = vmatpush1.msra.mxu0 0.0
    %864 = vmatprep.subr.mxu0 0.0
    %865 = vmatpush1.msra.mxu0 0.0
    %866 = vmatprep.subr.mxu0 0.0
    %867 = vmatpush1.msra.mxu0 0.0
    %868 = vmatprep.subr.mxu0 0.0
    %869 = vmatpush1.msra.mxu0 0.0
    %870 = vmatprep.subr.mxu0 0.0
    %871 = vmatpush1.msra.mxu0 0.0
    %872 = vmatprep.subr.mxu0 0.0
    %873 = vmatpush1.msra.mxu0 0.0
    %874 = vmatprep.subr.mxu0 0.0
    %875 = vmatpush1.msra.mxu0 0.0
    %876 = vmatprep.subr.mxu0 0.0
    %877 = vmatpush1.msra.mxu0 0.0
    %878 = vmatprep.subr.mxu0 0.0
    %879 = vmatpush1.msra.mxu0 0.0
    %880 = vmatprep.subr.mxu0 0.0
    %881 = vmatpush1.msra.mxu0 0.0
    %882 = vmatprep.subr.mxu0 0.0
    %883 = vmatpush1.msra.mxu0 0.0
    %884 = vmatprep.subr.mxu0 0.0
    %885 = vmatpush1.msra.mxu0 0.0
    %886 = vmatprep.subr.mxu0 0.0
    %887 = vmatpush1.msra.mxu0 0.0
    %888 = vmatprep.subr.mxu0 0.0
    %889 = vmatpush1.msra.mxu0 0.0
    %890 = vmatprep.mubr.f32.mxu0 0.0
    %891 = vmatmul.mubr.f32.gmra.mrb[0].mxu0 %v824
    %v892 = vpop.f32.mrb[0].mxu0
    %v893 = vadd.f32 0.0, %v892
    %v894 = vpop.f32.mrb[0].mxu0
    %895 = vdwg.mxu0
    %v896 = vlaneseq
    %v897 = vshrl.u32 %v896, 7
    %v898 = vsub.s32 0, %v897
    %v899 = vrot.slane %v893, %v898
    %v900 = vmul.f32 %v696, %v899
    %v901 = vlaneseq
    %v902 = vshrl.u32 %v901, 7
    %v903 = vsub.s32 1, %v902
    %v904 = vrot.slane %v893, %v903
    %v905 = vadd.f32 %v900, %v904
    %vm906 = vcmp.ge.f32.partialorder %v905, 0.0
    %v907 = vmul.f32 %v905, 0.01
    %v908 = vsel %vm906, %v905, %v907
    %v909 = vld [vmem:[#allocation2 + $0x3c0] sm:$0xff]
    %v910 = vld [vmem:[#allocation2 + $0x3c8] sm:$0xff]
    %v911 = vld [vmem:[#allocation2 + $0x3d0] sm:$0xff]
    %v912 = vld [vmem:[#allocation2 + $0x3d8] sm:$0xff]
    %v913 = vld [vmem:[#allocation2 + $0x3e0] sm:$0xff]
    %v914 = vld [vmem:[#allocation2 + $0x3e8] sm:$0xff]
    %v915 = vld [vmem:[#allocation2 + $0x3f0] sm:$0xff]
    %v916 = vld [vmem:[#allocation2 + $0x3f8] sm:$0xff]
    %v917 = vld [vmem:[#allocation2 + $0x400] sm:$0xff]
    %v918 = vld [vmem:[#allocation2 + $0x408] sm:$0xff]
    %v919 = vld [vmem:[#allocation2 + $0x410] sm:$0xff]
    %v920 = vld [vmem:[#allocation2 + $0x418] sm:$0xff]
    %v921 = vld [vmem:[#allocation2 + $0x420] sm:$0xff]
    %v922 = vld [vmem:[#allocation2 + $0x428] sm:$0xff]
    %v923 = vld [vmem:[#allocation2 + $0x430] sm:$0xff]
    %v924 = vld [vmem:[#allocation2 + $0x438] sm:$0xff]
    %v925 = vld [vmem:[#allocation2 + $0x440] sm:$0xff]
    %v926 = vld [vmem:[#allocation2 + $0x448] sm:$0xff]
    %v927 = vld [vmem:[#allocation2 + $0x450] sm:$0xff]
    %v928 = vld [vmem:[#allocation2 + $0x458] sm:$0xff]
    %v929 = vld [vmem:[#allocation2 + $0x460] sm:$0xff]
    %v930 = vld [vmem:[#allocation2 + $0x468] sm:$0xff]
    %v931 = vld [vmem:[#allocation2 + $0x470] sm:$0xff]
    %v932 = vld [vmem:[#allocation2 + $0x478] sm:$0xff]
    %v933 = vld [vmem:[#allocation2 + $0x480] sm:$0xff]
    %v934 = vld [vmem:[#allocation2 + $0x488] sm:$0xff]
    %v935 = vld [vmem:[#allocation2 + $0x490] sm:$0xff]
    %v936 = vld [vmem:[#allocation2 + $0x498] sm:$0xff]
    %v937 = vld [vmem:[#allocation2 + $0x4a0] sm:$0xff]
    %v938 = vld [vmem:[#allocation2 + $0x4a8] sm:$0xff]
    %v939 = vld [vmem:[#allocation2 + $0x4b0] sm:$0xff]
    %v940 = vld [vmem:[#allocation2 + $0x4b8] sm:$0xff]
    %s941 = scalar_lea.vmem [#allocation2], 1248
    %v942 = vld [vmem:[%s941] ss:$8 sm:$0x3]
    %v944 = vlaneseq
    %v945 = vshrl.u32 %v944, 7
    %v946 = vsub.s32 0, %v945
    %v947 = vrot.slane %v942, %v946
    %v948 = vlaneseq
    %v949 = vshrl.u32 %v948, 7
    %v950 = vsub.s32 1, %v949
    %v951 = vrot.slane %v942, %v950
    %954 = vmatprep.subr.mxu0 %v910
    %955 = vmatpush1.msra.mxu0 %v909
    %956 = vmatprep.subr.mxu0 %v912
    %957 = vmatpush1.msra.mxu0 %v911
    %958 = vmatprep.subr.mxu0 %v914
    %959 = vmatpush1.msra.mxu0 %v913
    %960 = vmatprep.subr.mxu0 %v916
    %961 = vmatpush1.msra.mxu0 %v915
    %962 = vmatprep.subr.mxu0 %v918
    %963 = vmatpush1.msra.mxu0 %v917
    %964 = vmatprep.subr.mxu0 %v920
    %965 = vmatpush1.msra.mxu0 %v919
    %966 = vmatprep.subr.mxu0 %v922
    %967 = vmatpush1.msra.mxu0 %v921
    %968 = vmatprep.subr.mxu0 %v924
    %969 = vmatpush1.msra.mxu0 %v923
    %970 = vmatprep.subr.mxu0 %v926
    %971 = vmatpush1.msra.mxu0 %v925
    %972 = vmatprep.subr.mxu0 %v928
    %973 = vmatpush1.msra.mxu0 %v927
    %974 = vmatprep.subr.mxu0 %v930
    %975 = vmatpush1.msra.mxu0 %v929
    %976 = vmatprep.subr.mxu0 %v932
    %977 = vmatpush1.msra.mxu0 %v931
    %978 = vmatprep.subr.mxu0 %v934
    %979 = vmatpush1.msra.mxu0 %v933
    %980 = vmatprep.subr.mxu0 %v936
    %981 = vmatpush1.msra.mxu0 %v935
    %982 = vmatprep.subr.mxu0 %v938
    %983 = vmatpush1.msra.mxu0 %v937
    %984 = vmatprep.subr.mxu0 %v940
    %985 = vmatpush1.msra.mxu0 %v939
    %986 = vmatprep.subr.mxu0 0.0
    %987 = vmatpush1.msra.mxu0 0.0
    %988 = vmatprep.subr.mxu0 0.0
    %989 = vmatpush1.msra.mxu0 0.0
    %990 = vmatprep.subr.mxu0 0.0
    %991 = vmatpush1.msra.mxu0 0.0
    %992 = vmatprep.subr.mxu0 0.0
    %993 = vmatpush1.msra.mxu0 0.0
    %994 = vmatprep.subr.mxu0 0.0
    %995 = vmatpush1.msra.mxu0 0.0
    %996 = vmatprep.subr.mxu0 0.0
    %997 = vmatpush1.msra.mxu0 0.0
    %998 = vmatprep.subr.mxu0 0.0
    %999 = vmatpush1.msra.mxu0 0.0
    %1000 = vmatprep.subr.mxu0 0.0
    %1001 = vmatpush1.msra.mxu0 0.0
    %1002 = vmatprep.subr.mxu0 0.0
    %1003 = vmatpush1.msra.mxu0 0.0
    %1004 = vmatprep.subr.mxu0 0.0
    %1005 = vmatpush1.msra.mxu0 0.0
    %1006 = vmatprep.subr.mxu0 0.0
    %1007 = vmatpush1.msra.mxu0 0.0
    %1008 = vmatprep.subr.mxu0 0.0
    %1009 = vmatpush1.msra.mxu0 0.0
    %1010 = vmatprep.subr.mxu0 0.0
    %1011 = vmatpush1.msra.mxu0 0.0
    %1012 = vmatprep.subr.mxu0 0.0
    %1013 = vmatpush1.msra.mxu0 0.0
    %1014 = vmatprep.subr.mxu0 0.0
    %1015 = vmatpush1.msra.mxu0 0.0
    %1016 = vmatprep.subr.mxu0 0.0
    %1017 = vmatpush1.msra.mxu0 0.0
    %1018 = vmatprep.mubr.f32.mxu0 0.0
    %1019 = vmatmul.mubr.f32.gmra.mrb[0].mxu0 %v908
    %v1020 = vpop.f32.mrb[0].mxu0
    %v1021 = vadd.f32 %v947, %v1020
    %v1022 = vpop.f32.mrb[0].mxu0
    %v1023 = vadd.f32 %v951, %v1022
    %1024 = vdwg.mxu0
    %v1025 = vld [vmem:[%s4 + $0x180] sm:$0xff]
    %v1026 = vld [vmem:[%s4 + $0x188] sm:$0xff]
    %v1027 = vld [vmem:[%s4 + $0x190] sm:$0xff]
    %v1028 = vld [vmem:[%s4 + $0x198] sm:$0xff]
    %v1029 = vld [vmem:[%s4 + $0x1a0] sm:$0xff]
    %v1030 = vld [vmem:[%s4 + $0x1a8] sm:$0xff]
    %v1031 = vld [vmem:[%s4 + $0x1b0] sm:$0xff]
    %v1032 = vld [vmem:[%s4 + $0x1b8] sm:$0xff]
    %v1033 = vld [vmem:[%s4 + $0x1c0] sm:$0xff]
    %v1034 = vld [vmem:[%s4 + $0x1c8] sm:$0xff]
    %v1035 = vld [vmem:[%s4 + $0x1d0] sm:$0xff]
    %v1036 = vld [vmem:[%s4 + $0x1d8] sm:$0xff]
    %v1037 = vld [vmem:[%s4 + $0x1e0] sm:$0xff]
    %v1038 = vld [vmem:[%s4 + $0x1e8] sm:$0xff]
    %v1039 = vld [vmem:[%s4 + $0x1f0] sm:$0xff]
    %v1040 = vld [vmem:[%s4 + $0x1f8] sm:$0xff]
    %v1041 = vld [vmem:[%s4 + $0x200] sm:$0xff]
    %v1042 = vld [vmem:[%s4 + $0x208] sm:$0xff]
    %v1043 = vld [vmem:[%s4 + $0x210] sm:$0xff]
    %v1044 = vld [vmem:[%s4 + $0x218] sm:$0xff]
    %v1045 = vld [vmem:[%s4 + $0x220] sm:$0xff]
    %v1046 = vld [vmem:[%s4 + $0x228] sm:$0xff]
    %v1047 = vld [vmem:[%s4 + $0x230] sm:$0xff]
    %v1048 = vld [vmem:[%s4 + $0x238] sm:$0xff]
    %v1049 = vld [vmem:[%s4 + $0x240] sm:$0xff]
    %v1050 = vld [vmem:[%s4 + $0x248] sm:$0xff]
    %v1051 = vld [vmem:[%s4 + $0x250] sm:$0xff]
    %v1052 = vld [vmem:[%s4 + $0x258] sm:$0xff]
    %v1053 = vld [vmem:[%s4 + $0x260] sm:$0xff]
    %v1054 = vld [vmem:[%s4 + $0x268] sm:$0xff]
    %v1055 = vld [vmem:[%s4 + $0x270] sm:$0xff]
    %v1056 = vld [vmem:[%s4 + $0x278] sm:$0xff]
    %v1057 = vld [vmem:[#allocation2 + $0x4d0] sm:$0xff]
    %v1058 = vld [vmem:[#allocation2 + $0x4d8] sm:$0xff]
    %v1059 = vsel %vm369, %v1021, 0.0
    %v1060 = vrot.slane %v1059, 4
    %v1061 = vadd.f32 %v1059, %v1060
    %v1062 = vrot.slane %v1061, 2
    %v1063 = vadd.f32 %v1061, %v1062
    %v1064 = vrot.slane %v1063, 1
    %v1065 = vadd.f32 %v1063, %v1064
    %v1066 = vsel %vm369, %v1023, 0.0
    %v1067 = vrot.slane %v1066, 4
    %v1068 = vadd.f32 %v1066, %v1067
    %v1069 = vrot.slane %v1068, 2
    %v1070 = vadd.f32 %v1068, %v1069
    %v1071 = vrot.slane %v1070, 1
    %v1072 = vadd.f32 %v1070, %v1071
    %v1073 = vmul.f32 %v1021, %v1021
    %v1074 = vmul.f32 %v1023, %v1023
    %v1075 = vsel %vm369, %v1073, 0.0
    %v1076 = vrot.slane %v1075, 4
    %v1077 = vadd.f32 %v1075, %v1076
    %v1078 = vrot.slane %v1077, 2
    %v1079 = vadd.f32 %v1077, %v1078
    %v1080 = vrot.slane %v1079, 1
    %v1081 = vadd.f32 %v1079, %v1080
    %v1082 = vsel %vm369, %v1074, 0.0
    %v1083 = vrot.slane %v1082, 4
    %v1084 = vadd.f32 %v1082, %v1083
    %v1085 = vrot.slane %v1084, 2
    %v1086 = vadd.f32 %v1084, %v1085
    %v1087 = vrot.slane %v1086, 1
    %v1088 = vadd.f32 %v1086, %v1087
    %v1089 = vsel %vm402, %v1065, %v1081
    %v1090 = vsel %vm402, %v1072, %v1088
    %1091 = vmatprep.subr.mxu0 0.0
    %1092 = vmatpush1.msra.mxu0 %v1025
    %1093 = vmatprep.subr.mxu0 0.0
    %1094 = vmatpush1.msra.mxu0 %v1026
    %1095 = vmatprep.subr.mxu0 0.0
    %1096 = vmatpush1.msra.mxu0 %v1027
    %1097 = vmatprep.subr.mxu0 0.0
    %1098 = vmatpush1.msra.mxu0 %v1028
    %1099 = vmatprep.subr.mxu0 0.0
    %1100 = vmatpush1.msra.mxu0 %v1029
    %1101 = vmatprep.subr.mxu0 0.0
    %1102 = vmatpush1.msra.mxu0 %v1030
    %1103 = vmatprep.subr.mxu0 0.0
    %1104 = vmatpush1.msra.mxu0 %v1031
    %1105 = vmatprep.subr.mxu0 0.0
    %1106 = vmatpush1.msra.mxu0 %v1032
    %1107 = vmatprep.subr.mxu0 0.0
    %1108 = vmatpush1.msra.mxu0 %v1033
    %1109 = vmatprep.subr.mxu0 0.0
    %1110 = vmatpush1.msra.mxu0 %v1034
    %1111 = vmatprep.subr.mxu0 0.0
    %1112 = vmatpush1.msra.mxu0 %v1035
    %1113 = vmatprep.subr.mxu0 0.0
    %1114 = vmatpush1.msra.mxu0 %v1036
    %1115 = vmatprep.subr.mxu0 0.0
    %1116 = vmatpush1.msra.mxu0 %v1037
    %1117 = vmatprep.subr.mxu0 0.0
    %1118 = vmatpush1.msra.mxu0 %v1038
    %1119 = vmatprep.subr.mxu0 0.0
    %1120 = vmatpush1.msra.mxu0 %v1039
    %1121 = vmatprep.subr.mxu0 0.0
    %1122 = vmatpush1.msra.mxu0 %v1040
    %1123 = vmatprep.subr.mxu0 0.0
    %1124 = vmatpush1.msra.mxu0 %v1041
    %1125 = vmatprep.subr.mxu0 0.0
    %1126 = vmatpush1.msra.mxu0 %v1042
    %1127 = vmatprep.subr.mxu0 0.0
    %1128 = vmatpush1.msra.mxu0 %v1043
    %1129 = vmatprep.subr.mxu0 0.0
    %1130 = vmatpush1.msra.mxu0 %v1044
    %1131 = vmatprep.subr.mxu0 0.0
    %1132 = vmatpush1.msra.mxu0 %v1045
    %1133 = vmatprep.subr.mxu0 0.0
    %1134 = vmatpush1.msra.mxu0 %v1046
    %1135 = vmatprep.subr.mxu0 0.0
    %1136 = vmatpush1.msra.mxu0 %v1047
    %1137 = vmatprep.subr.mxu0 0.0
    %1138 = vmatpush1.msra.mxu0 %v1048
    %1139 = vmatprep.subr.mxu0 0.0
    %1140 = vmatpush1.msra.mxu0 %v1049
    %1141 = vmatprep.subr.mxu0 0.0
    %1142 = vmatpush1.msra.mxu0 %v1050
    %1143 = vmatprep.subr.mxu0 0.0
    %1144 = vmatpush1.msra.mxu0 %v1051
    %1145 = vmatprep.subr.mxu0 0.0
    %1146 = vmatpush1.msra.mxu0 %v1052
    %1147 = vmatprep.subr.mxu0 0.0
    %1148 = vmatpush1.msra.mxu0 %v1053
    %1149 = vmatprep.subr.mxu0 0.0
    %1150 = vmatpush1.msra.mxu0 %v1054
    %1151 = vmatprep.subr.mxu0 0.0
    %1152 = vmatpush1.msra.mxu0 %v1055
    %1153 = vmatprep.subr.mxu0 0.0
    %1154 = vmatpush1.msra.mxu0 %v1056
    %1155 = vmatprep.mubr.f32.mxu0 %v1090
    %1156 = vmatmul.mubr.f32.gmra.mrb[0].mxu0 %v1089
    %v1157 = vpop.f32.mrb[0].mxu0
    %v1158 = vadd.f32 0.0, %v1157
    %v1159 = vpop.f32.mrb[0].mxu0
    %1160 = vdwg.mxu0
    %v1161 = vmul.f32 %v1158, %v1158
    %v1163 = vrot.slane %v1161, 7
    %v1165 = vsub.f32 %v1158, %v1163
    %v1166 = vadd.f32 %v1165, 1e-05
    %v1167 = vrsqrt.pop %v1166
    %v1168 = vsub.f32 0.0, %v1158
    %v1170 = vrot.slane %v1167, 1
    %v1172 = vmul.f32 %v1168, %v1170
    %v1173 = vlaneseq
    %v1174 = vshrl.u32 %v1173, 7
    %v1175 = vsub.s32 1, %v1174
    %v1176 = vrot.slane %v1167, %v1175
    %v1177 = vlaneseq
    %v1178 = vshrl.u32 %v1177, 7
    %v1179 = vsub.s32 0, %v1178
    %v1180 = vrot.slane %v1172, %v1179
    %v1181 = vsel %vm402, %v1176, %v1180
    %v1183 = vsel %vm496, %v1181, 0
    %1185 = vmatprep.subr.mxu0 %v1058
    %1186 = vmatpush1.msra.mxu0 %v1057
    %1187 = vmatprep.subr.mxu0 0.0
    %1188 = vmatpush1.msra.mxu0 0.0
    %1189 = vmatprep.subr.mxu0 0.0
    %1190 = vmatpush1.msra.mxu0 0.0
    %1191 = vmatprep.subr.mxu0 0.0
    %1192 = vmatpush1.msra.mxu0 0.0
    %1193 = vmatprep.subr.mxu0 0.0
    %1194 = vmatpush1.msra.mxu0 0.0
    %1195 = vmatprep.subr.mxu0 0.0
    %1196 = vmatpush1.msra.mxu0 0.0
    %1197 = vmatprep.subr.mxu0 0.0
    %1198 = vmatpush1.msra.mxu0 0.0
    %1199 = vmatprep.subr.mxu0 0.0
    %1200 = vmatpush1.msra.mxu0 0.0
    %1201 = vmatprep.subr.mxu0 0.0
    %1202 = vmatpush1.msra.mxu0 0.0
    %1203 = vmatprep.subr.mxu0 0.0
    %1204 = vmatpush1.msra.mxu0 0.0
    %1205 = vmatprep.subr.mxu0 0.0
    %1206 = vmatpush1.msra.mxu0 0.0
    %1207 = vmatprep.subr.mxu0 0.0
    %1208 = vmatpush1.msra.mxu0 0.0
    %1209 = vmatprep.subr.mxu0 0.0
    %1210 = vmatpush1.msra.mxu0 0.0
    %1211 = vmatprep.subr.mxu0 0.0
    %1212 = vmatpush1.msra.mxu0 0.0
    %1213 = vmatprep.subr.mxu0 0.0
    %1214 = vmatpush1.msra.mxu0 0.0
    %1215 = vmatprep.subr.mxu0 0.0
    %1216 = vmatpush1.msra.mxu0 0.0
    %1217 = vmatprep.subr.mxu0 0.0
    %1218 = vmatpush1.msra.mxu0 0.0
    %1219 = vmatprep.subr.mxu0 0.0
    %1220 = vmatpush1.msra.mxu0 0.0
    %1221 = vmatprep.subr.mxu0 0.0
    %1222 = vmatpush1.msra.mxu0 0.0
    %1223 = vmatprep.subr.mxu0 0.0
    %1224 = vmatpush1.msra.mxu0 0.0
    %1225 = vmatprep.subr.mxu0 0.0
    %1226 = vmatpush1.msra.mxu0 0.0
    %1227 = vmatprep.subr.mxu0 0.0
    %1228 = vmatpush1.msra.mxu0 0.0
    %1229 = vmatprep.subr.mxu0 0.0
    %1230 = vmatpush1.msra.mxu0 0.0
    %1231 = vmatprep.subr.mxu0 0.0
    %1232 = vmatpush1.msra.mxu0 0.0
    %1233 = vmatprep.subr.mxu0 0.0
    %1234 = vmatpush1.msra.mxu0 0.0
    %1235 = vmatprep.subr.mxu0 0.0
    %1236 = vmatpush1.msra.mxu0 0.0
    %1237 = vmatprep.subr.mxu0 0.0
    %1238 = vmatpush1.msra.mxu0 0.0
    %1239 = vmatprep.subr.mxu0 0.0
    %1240 = vmatpush1.msra.mxu0 0.0
    %1241 = vmatprep.subr.mxu0 0.0
    %1242 = vmatpush1.msra.mxu0 0.0
    %1243 = vmatprep.subr.mxu0 0.0
    %1244 = vmatpush1.msra.mxu0 0.0
    %1245 = vmatprep.subr.mxu0 0.0
    %1246 = vmatpush1.msra.mxu0 0.0
    %1247 = vmatprep.subr.mxu0 0.0
    %1248 = vmatpush1.msra.mxu0 0.0
    %1249 = vmatprep.mubr.f32.mxu0 0.0
    %1250 = vmatmul.mubr.f32.gmra.mrb[0].mxu0 %v1183
    %v1251 = vpop.f32.mrb[0].mxu0
    %v1252 = vadd.f32 0.0, %v1251
    %v1253 = vpop.f32.mrb[0].mxu0
    %v1254 = vadd.f32 0.0, %v1253
    %1255 = vdwg.mxu0
    %v1256 = vlaneseq
    %v1257 = vshrl.u32 %v1256, 7
    %v1258 = vsub.s32 0, %v1257
    %v1259 = vrot.slane %v1252, %v1258
    %v1260 = vlaneseq
    %v1261 = vshrl.u32 %v1260, 7
    %v1262 = vsub.s32 0, %v1261
    %v1263 = vrot.slane %v1254, %v1262
    %v1264 = vmul.f32 %v1021, %v1259
    %v1265 = vmul.f32 %v1023, %v1263
    %v1266 = vlaneseq
    %v1267 = vshrl.u32 %v1266, 7
    %v1268 = vsub.s32 1, %v1267
    %v1269 = vrot.slane %v1252, %v1268
    %v1270 = vlaneseq
    %v1271 = vshrl.u32 %v1270, 7
    %v1272 = vsub.s32 1, %v1271
    %v1273 = vrot.slane %v1254, %v1272
    %v1274 = vadd.f32 %v1264, %v1269
    %v1275 = vadd.f32 %v1265, %v1273
    %vm1276 = vcmp.ge.f32.partialorder %v1274, 0.0
    %vm1277 = vcmp.ge.f32.partialorder %v1275, 0.0
    %v1278 = vmul.f32 %v1274, 0.01
    %v1279 = vmul.f32 %v1275, 0.01
    %v1280 = vsel %vm1276, %v1274, %v1278
    %v1281 = vsel %vm1277, %v1275, %v1279
    %v1282 = vld [vmem:[#allocation4] sm:$0xff]
    %v1283 = vld [vmem:[#allocation4 + $0x8] sm:$0xff]
    %v1284 = vld [vmem:[#allocation4 + $0x10] sm:$0xff]
    %v1285 = vld [vmem:[#allocation4 + $0x18] sm:$0xff]
    %v1286 = vld [vmem:[#allocation4 + $0x20] sm:$0xff]
    %v1287 = vld [vmem:[#allocation4 + $0x28] sm:$0xff]
    %v1288 = vld [vmem:[#allocation4 + $0x30] sm:$0xff]
    %v1289 = vld [vmem:[#allocation4 + $0x38] sm:$0xff]
    %v1290 = vld [vmem:[#allocation4 + $0x40] sm:$0xff]
    %v1291 = vld [vmem:[#allocation4 + $0x48] sm:$0xff]
    %v1292 = vld [vmem:[#allocation4 + $0x50] sm:$0xff]
    %v1293 = vld [vmem:[#allocation4 + $0x58] sm:$0xff]
    %v1294 = vld [vmem:[#allocation4 + $0x60] sm:$0xff]
    %v1295 = vld [vmem:[#allocation4 + $0x68] sm:$0xff]
    %v1296 = vld [vmem:[#allocation4 + $0x70] sm:$0xff]
    %v1297 = vld [vmem:[#allocation4 + $0x78] sm:$0xff]
    %v1298 = vld [vmem:[#allocation4 + $0x80] sm:$0xff]
    %v1299 = vld [vmem:[#allocation4 + $0x88] sm:$0xff]
    %v1300 = vld [vmem:[#allocation4 + $0x90] sm:$0xff]
    %v1301 = vld [vmem:[#allocation4 + $0x98] sm:$0xff]
    %v1302 = vld [vmem:[#allocation4 + $0xa0] sm:$0xff]
    %v1303 = vld [vmem:[#allocation4 + $0xa8] sm:$0xff]
    %v1304 = vld [vmem:[#allocation4 + $0xb0] sm:$0xff]
    %v1305 = vld [vmem:[#allocation4 + $0xb8] sm:$0xff]
    %v1306 = vld [vmem:[#allocation4 + $0xc0] sm:$0xff]
    %v1307 = vld [vmem:[#allocation4 + $0xc8] sm:$0xff]
    %v1308 = vld [vmem:[#allocation4 + $0xd0] sm:$0xff]
    %v1309 = vld [vmem:[#allocation4 + $0xd8] sm:$0xff]
    %v1310 = vld [vmem:[#allocation4 + $0xe0] sm:$0xff]
    %v1311 = vld [vmem:[#allocation4 + $0xe8] sm:$0xff]
    %v1312 = vld [vmem:[#allocation4 + $0xf0] sm:$0xff]
    %v1313 = vld [vmem:[#allocation4 + $0xf8] sm:$0xff]
    %v1314 = vld [vmem:[#allocation4 + $0x100] sm:$0xff]
    %v1315 = vld [vmem:[#allocation4 + $0x108] sm:$0xff]
    %v1316 = vld [vmem:[#allocation4 + $0x110] sm:$0xff]
    %v1317 = vld [vmem:[#allocation4 + $0x118] sm:$0xff]
    %v1318 = vld [vmem:[#allocation4 + $0x120] sm:$0xff]
    %v1319 = vld [vmem:[#allocation4 + $0x128] sm:$0xff]
    %v1320 = vld [vmem:[#allocation4 + $0x130] sm:$0xff]
    %v1321 = vld [vmem:[#allocation4 + $0x138] sm:$0xff]
    %v1322 = vld [vmem:[#allocation4 + $0x140] sm:$0xff]
    %v1323 = vld [vmem:[#allocation4 + $0x148] sm:$0xff]
    %v1324 = vld [vmem:[#allocation4 + $0x150] sm:$0xff]
    %v1325 = vld [vmem:[#allocation4 + $0x158] sm:$0xff]
    %v1326 = vld [vmem:[#allocation4 + $0x160] sm:$0xff]
    %v1327 = vld [vmem:[#allocation4 + $0x168] sm:$0xff]
    %v1328 = vld [vmem:[#allocation4 + $0x170] sm:$0xff]
    %v1329 = vld [vmem:[#allocation4 + $0x178] sm:$0xff]
    %v1330 = vld [vmem:[#allocation4 + $0x180] sm:$0xff]
    %v1331 = vld [vmem:[#allocation4 + $0x188] sm:$0xff]
    %v1332 = vld [vmem:[#allocation4 + $0x190] sm:$0xff]
    %v1333 = vld [vmem:[#allocation4 + $0x198] sm:$0xff]
    %v1334 = vld [vmem:[#allocation4 + $0x1a0] sm:$0xff]
    %v1335 = vld [vmem:[#allocation4 + $0x1a8] sm:$0xff]
    %v1336 = vld [vmem:[#allocation4 + $0x1b0] sm:$0xff]
    %v1337 = vld [vmem:[#allocation4 + $0x1b8] sm:$0xff]
    %v1338 = vld [vmem:[#allocation4 + $0x1c0] sm:$0xff]
    %v1339 = vld [vmem:[#allocation4 + $0x1c8] sm:$0xff]
    %v1340 = vld [vmem:[#allocation4 + $0x1d0] sm:$0xff]
    %v1341 = vld [vmem:[#allocation4 + $0x1d8] sm:$0xff]
    %v1342 = vld [vmem:[#allocation4 + $0x1e0] sm:$0xff]
    %v1343 = vld [vmem:[#allocation4 + $0x1e8] sm:$0xff]
    %v1344 = vld [vmem:[#allocation4 + $0x1f0] sm:$0xff]
    %v1345 = vld [vmem:[#allocation4 + $0x1f8] sm:$0xff]
    %v1346 = vld [vmem:[#allocation4 + $0x200] sm:$0xff]
    %v1347 = vld [vmem:[#allocation4 + $0x208] sm:$0xff]
    %v1348 = vld [vmem:[#allocation4 + $0x210] sm:$0xff]
    %v1349 = vld [vmem:[#allocation4 + $0x218] sm:$0xff]
    %v1350 = vld [vmem:[#allocation4 + $0x220] sm:$0xff]
    %v1351 = vld [vmem:[#allocation4 + $0x228] sm:$0xff]
    %v1352 = vld [vmem:[#allocation4 + $0x230] sm:$0xff]
    %v1353 = vld [vmem:[#allocation4 + $0x238] sm:$0xff]
    %v1354 = vld [vmem:[#allocation4 + $0x240] sm:$0xff]
    %v1355 = vld [vmem:[#allocation4 + $0x248] sm:$0xff]
    %v1356 = vld [vmem:[#allocation4 + $0x250] sm:$0xff]
    %v1357 = vld [vmem:[#allocation4 + $0x258] sm:$0xff]
    %v1358 = vld [vmem:[#allocation4 + $0x260] sm:$0xff]
    %v1359 = vld [vmem:[#allocation4 + $0x268] sm:$0xff]
    %v1360 = vld [vmem:[#allocation4 + $0x270] sm:$0xff]
    %v1361 = vld [vmem:[#allocation4 + $0x278] sm:$0xff]
    %v1362 = vld [vmem:[#allocation4 + $0x280] sm:$0xff]
    %v1363 = vld [vmem:[#allocation4 + $0x288] sm:$0xff]
    %v1364 = vld [vmem:[#allocation4 + $0x290] sm:$0xff]
    %v1365 = vld [vmem:[#allocation4 + $0x298] sm:$0xff]
    %v1366 = vld [vmem:[#allocation4 + $0x2a0] sm:$0xff]
    %v1367 = vld [vmem:[#allocation4 + $0x2a8] sm:$0xff]
    %v1368 = vld [vmem:[#allocation4 + $0x2b0] sm:$0xff]
    %v1369 = vld [vmem:[#allocation4 + $0x2b8] sm:$0xff]
    %v1370 = vld [vmem:[#allocation4 + $0x2c0] sm:$0xff]
    %v1371 = vld [vmem:[#allocation4 + $0x2c8] sm:$0xff]
    %v1372 = vld [vmem:[#allocation4 + $0x2d0] sm:$0xff]
    %v1373 = vld [vmem:[#allocation4 + $0x2d8] sm:$0xff]
    %v1374 = vld [vmem:[#allocation4 + $0x2e0] sm:$0xff]
    %v1375 = vld [vmem:[#allocation4 + $0x2e8] sm:$0xff]
    %v1376 = vld [vmem:[#allocation4 + $0x2f0] sm:$0xff]
    %v1377 = vld [vmem:[#allocation4 + $0x2f8] sm:$0xff]
    %v1378 = vld [vmem:[#allocation4 + $0x300] sm:$0xff]
    %v1379 = vld [vmem:[#allocation4 + $0x308] sm:$0xff]
    %v1380 = vld [vmem:[#allocation4 + $0x310] sm:$0xff]
    %v1381 = vld [vmem:[#allocation4 + $0x318] sm:$0xff]
    %v1382 = vld [vmem:[#allocation4 + $0x320] sm:$0xff]
    %v1383 = vld [vmem:[#allocation4 + $0x328] sm:$0xff]
    %v1384 = vld [vmem:[#allocation4 + $0x330] sm:$0xff]
    %v1385 = vld [vmem:[#allocation4 + $0x338] sm:$0xff]
    %v1386 = vld [vmem:[#allocation4 + $0x340] sm:$0xff]
    %v1387 = vld [vmem:[#allocation4 + $0x348] sm:$0xff]
    %v1388 = vld [vmem:[#allocation4 + $0x350] sm:$0xff]
    %v1389 = vld [vmem:[#allocation4 + $0x358] sm:$0xff]
    %v1390 = vld [vmem:[#allocation4 + $0x360] sm:$0xff]
    %v1391 = vld [vmem:[#allocation4 + $0x368] sm:$0xff]
    %v1392 = vld [vmem:[#allocation4 + $0x370] sm:$0xff]
    %v1393 = vld [vmem:[#allocation4 + $0x378] sm:$0xff]
    %v1394 = vld [vmem:[#allocation4 + $0x380] sm:$0xff]
    %v1395 = vld [vmem:[#allocation4 + $0x388] sm:$0xff]
    %v1396 = vld [vmem:[#allocation4 + $0x390] sm:$0xff]
    %v1397 = vld [vmem:[#allocation4 + $0x398] sm:$0xff]
    %v1398 = vld [vmem:[#allocation4 + $0x3a0] sm:$0xff]
    %v1399 = vld [vmem:[#allocation4 + $0x3a8] sm:$0xff]
    %v1400 = vld [vmem:[#allocation4 + $0x3b0] sm:$0xff]
    %v1401 = vld [vmem:[#allocation4 + $0x3b8] sm:$0xff]
    %v1402 = vld [vmem:[#allocation4 + $0x3c0] sm:$0xff]
    %v1403 = vld [vmem:[#allocation4 + $0x3c8] sm:$0xff]
    %v1404 = vld [vmem:[#allocation4 + $0x3d0] sm:$0xff]
    %v1405 = vld [vmem:[#allocation4 + $0x3d8] sm:$0xff]
    %v1406 = vld [vmem:[#allocation4 + $0x3e0] sm:$0xff]
    %v1407 = vld [vmem:[#allocation4 + $0x3e8] sm:$0xff]
    %v1408 = vld [vmem:[#allocation4 + $0x3f0] sm:$0xff]
    %v1409 = vld [vmem:[#allocation4 + $0x3f8] sm:$0xff]
    %s1410 = scalar_lea.vmem [#allocation4], 1024
    %v1411 = vld [vmem:[%s1410] ss:$8 sm:$0xf]
    %v1413 = vlaneseq
    %v1414 = vshrl.u32 %v1413, 7
    %v1415 = vsub.s32 0, %v1414
    %v1416 = vrot.slane %v1411, %v1415
    %v1417 = vlaneseq
    %v1418 = vshrl.u32 %v1417, 7
    %v1419 = vsub.s32 1, %v1418
    %v1420 = vrot.slane %v1411, %v1419
    %v1421 = vlaneseq
    %v1422 = vshrl.u32 %v1421, 7
    %v1423 = vsub.s32 2, %v1422
    %v1424 = vrot.slane %v1411, %v1423
    %v1425 = vlaneseq
    %v1426 = vshrl.u32 %v1425, 7
    %v1427 = vsub.s32 3, %v1426
    %v1428 = vrot.slane %v1411, %v1427
    %1433 = vmatprep.subr.mxu0 %v1283
    %1434 = vmatpush1.msra.mxu0 %v1282
    %1435 = vmatprep.subr.mxu0 %v1287
    %1436 = vmatpush1.msra.mxu0 %v1286
    %1437 = vmatprep.subr.mxu0 %v1291
    %1438 = vmatpush1.msra.mxu0 %v1290
    %1439 = vmatprep.subr.mxu0 %v1295
    %1440 = vmatpush1.msra.mxu0 %v1294
    %1441 = vmatprep.subr.mxu0 %v1299
    %1442 = vmatpush1.msra.mxu0 %v1298
    %1443 = vmatprep.subr.mxu0 %v1303
    %1444 = vmatpush1.msra.mxu0 %v1302
    %1445 = vmatprep.subr.mxu0 %v1307
    %1446 = vmatpush1.msra.mxu0 %v1306
    %1447 = vmatprep.subr.mxu0 %v1311
    %1448 = vmatpush1.msra.mxu0 %v1310
    %1449 = vmatprep.subr.mxu0 %v1315
    %1450 = vmatpush1.msra.mxu0 %v1314
    %1451 = vmatprep.subr.mxu0 %v1319
    %1452 = vmatpush1.msra.mxu0 %v1318
    %1453 = vmatprep.subr.mxu0 %v1323
    %1454 = vmatpush1.msra.mxu0 %v1322
    %1455 = vmatprep.subr.mxu0 %v1327
    %1456 = vmatpush1.msra.mxu0 %v1326
    %1457 = vmatprep.subr.mxu0 %v1331
    %1458 = vmatpush1.msra.mxu0 %v1330
    %1459 = vmatprep.subr.mxu0 %v1335
    %1460 = vmatpush1.msra.mxu0 %v1334
    %1461 = vmatprep.subr.mxu0 %v1339
    %1462 = vmatpush1.msra.mxu0 %v1338
    %1463 = vmatprep.subr.mxu0 %v1343
    %1464 = vmatpush1.msra.mxu0 %v1342
    %1465 = vmatprep.subr.mxu0 %v1347
    %1466 = vmatpush1.msra.mxu0 %v1346
    %1467 = vmatprep.subr.mxu0 %v1351
    %1468 = vmatpush1.msra.mxu0 %v1350
    %1469 = vmatprep.subr.mxu0 %v1355
    %1470 = vmatpush1.msra.mxu0 %v1354
    %1471 = vmatprep.subr.mxu0 %v1359
    %1472 = vmatpush1.msra.mxu0 %v1358
    %1473 = vmatprep.subr.mxu0 %v1363
    %1474 = vmatpush1.msra.mxu0 %v1362
    %1475 = vmatprep.subr.mxu0 %v1367
    %1476 = vmatpush1.msra.mxu0 %v1366
    %1477 = vmatprep.subr.mxu0 %v1371
    %1478 = vmatpush1.msra.mxu0 %v1370
    %1479 = vmatprep.subr.mxu0 %v1375
    %1480 = vmatpush1.msra.mxu0 %v1374
    %1481 = vmatprep.subr.mxu0 %v1379
    %1482 = vmatpush1.msra.mxu0 %v1378
    %1483 = vmatprep.subr.mxu0 %v1383
    %1484 = vmatpush1.msra.mxu0 %v1382
    %1485 = vmatprep.subr.mxu0 %v1387
    %1486 = vmatpush1.msra.mxu0 %v1386
    %1487 = vmatprep.subr.mxu0 %v1391
    %1488 = vmatpush1.msra.mxu0 %v1390
    %1489 = vmatprep.subr.mxu0 %v1395
    %1490 = vmatpush1.msra.mxu0 %v1394
    %1491 = vmatprep.subr.mxu0 %v1399
    %1492 = vmatpush1.msra.mxu0 %v1398
    %1493 = vmatprep.subr.mxu0 %v1403
    %1494 = vmatpush1.msra.mxu0 %v1402
    %1495 = vmatprep.subr.mxu0 %v1407
    %1496 = vmatpush1.msra.mxu0 %v1406
    %1497 = vmatprep.mubr.f32.mxu0 %v1281
    %1498 = vmatmul.mubr.f32.gmra.mrb[0].mxu0 %v1280
    %v1499 = vpop.f32.mrb[0].mxu0
    %v1500 = vadd.f32 %v1416, %v1499
    %v1501 = vpop.f32.mrb[0].mxu0
    %v1502 = vadd.f32 %v1420, %v1501
    %1503 = vdwg.mxu0
    %1504 = vmatprep.subr.mxu0 %v1285
    %1505 = vmatpush1.msra.mxu0 %v1284
    %1506 = vmatprep.subr.mxu0 %v1289
    %1507 = vmatpush1.msra.mxu0 %v1288
    %1508 = vmatprep.subr.mxu0 %v1293
    %1509 = vmatpush1.msra.mxu0 %v1292
    %1510 = vmatprep.subr.mxu0 %v1297
    %1511 = vmatpush1.msra.mxu0 %v1296
    %1512 = vmatprep.subr.mxu0 %v1301
    %1513 = vmatpush1.msra.mxu0 %v1300
    %1514 = vmatprep.subr.mxu0 %v1305
    %1515 = vmatpush1.msra.mxu0 %v1304
    %1516 = vmatprep.subr.mxu0 %v1309
    %1517 = vmatpush1.msra.mxu0 %v1308
    %1518 = vmatprep.subr.mxu0 %v1313
    %1519 = vmatpush1.msra.mxu0 %v1312
    %1520 = vmatprep.subr.mxu0 %v1317
    %1521 = vmatpush1.msra.mxu0 %v1316
    %1522 = vmatprep.subr.mxu0 %v1321
    %1523 = vmatpush1.msra.mxu0 %v1320
    %1524 = vmatprep.subr.mxu0 %v1325
    %1525 = vmatpush1.msra.mxu0 %v1324
    %1526 = vmatprep.subr.mxu0 %v1329
    %1527 = vmatpush1.msra.mxu0 %v1328
    %1528 = vmatprep.subr.mxu0 %v1333
    %1529 = vmatpush1.msra.mxu0 %v1332
    %1530 = vmatprep.subr.mxu0 %v1337
    %1531 = vmatpush1.msra.mxu0 %v1336
    %1532 = vmatprep.subr.mxu0 %v1341
    %1533 = vmatpush1.msra.mxu0 %v1340
    %1534 = vmatprep.subr.mxu0 %v1345
    %1535 = vmatpush1.msra.mxu0 %v1344
    %1536 = vmatprep.subr.mxu0 %v1349
    %1537 = vmatpush1.msra.mxu0 %v1348
    %1538 = vmatprep.subr.mxu0 %v1353
    %1539 = vmatpush1.msra.mxu0 %v1352
    %1540 = vmatprep.subr.mxu0 %v1357
    %1541 = vmatpush1.msra.mxu0 %v1356
    %1542 = vmatprep.subr.mxu0 %v1361
    %1543 = vmatpush1.msra.mxu0 %v1360
    %1544 = vmatprep.subr.mxu0 %v1365
    %1545 = vmatpush1.msra.mxu0 %v1364
    %1546 = vmatprep.subr.mxu0 %v1369
    %1547 = vmatpush1.msra.mxu0 %v1368
    %1548 = vmatprep.subr.mxu0 %v1373
    %1549 = vmatpush1.msra.mxu0 %v1372
    %1550 = vmatprep.subr.mxu0 %v1377
    %1551 = vmatpush1.msra.mxu0 %v1376
    %1552 = vmatprep.subr.mxu0 %v1381
    %1553 = vmatpush1.msra.mxu0 %v1380
    %1554 = vmatprep.subr.mxu0 %v1385
    %1555 = vmatpush1.msra.mxu0 %v1384
    %1556 = vmatprep.subr.mxu0 %v1389
    %1557 = vmatpush1.msra.mxu0 %v1388
    %1558 = vmatprep.subr.mxu0 %v1393
    %1559 = vmatpush1.msra.mxu0 %v1392
    %1560 = vmatprep.subr.mxu0 %v1397
    %1561 = vmatpush1.msra.mxu0 %v1396
    %1562 = vmatprep.subr.mxu0 %v1401
    %1563 = vmatpush1.msra.mxu0 %v1400
    %1564 = vmatprep.subr.mxu0 %v1405
    %1565 = vmatpush1.msra.mxu0 %v1404
    %1566 = vmatprep.subr.mxu0 %v1409
    %1567 = vmatpush1.msra.mxu0 %v1408
    %1568 = vmatprep.mubr.f32.mxu0 %v1281
    %1569 = vmatmul.mubr.f32.gmra.mrb[0].mxu0 %v1280
    %v1570 = vpop.f32.mrb[0].mxu0
    %v1571 = vadd.f32 %v1424, %v1570
    %v1572 = vpop.f32.mrb[0].mxu0
    %v1573 = vadd.f32 %v1428, %v1572
    %1574 = vdwg.mxu0
    %v1579 = vcombine.low %v1500, %v1502
    %v1580 = vcombine.low %v1571, %v1573
    %v1582 = vunpack.c.l.s4 1983009808
    %v1583 = vunpack.c.0.s8 %v1582
    %v1584 = vlaneseq
    %v1585 = vshrl.u32 %v1584, 7
    %v1586 = vsub.s32 %v1583, %v1585
    %v1587 = vrot.slane %v1579, %v1586
    %v1589 = vunpack.c.l.s4 1983009808
    %v1590 = vunpack.c.0.s8 %v1589
    %v1591 = vlaneseq
    %v1592 = vshrl.u32 %v1591, 7
    %v1593 = vsub.s32 %v1590, %v1592
    %v1594 = vrot.slane %v1580, %v1593
    %v1595 = vcombine.low %v1587, %v1594
    %1597 = vst [vmem:[%s5] sm:$0xff] %v1595
    // Predicated region
    $region30: #{forward.1} parent=1 // pred_check
      _
    $region31: #{forward.1} parent=1 // pred_check_branch
      %1599 = sbr.rel (0) target = $region33
    $region32: #{forward.1} parent=1 // pred_region
      _
    $region33: #{forward.1} parent=1 // pred_fallthru
      _
    // Predicated region
    $region34: #{forward.1} parent=1 // pred_check
      _
    $region35: #{forward.1} parent=1 // pred_check_branch
      %1601 = sbr.rel (0) target = $region37
    $region36: #{forward.1} parent=1 // pred_region
      _
    $region37: #{forward.1} parent=1 // pred_fallthru
      _
    %1602 = vsyncpa [#allocation3], 1
    %1603 = vsyncpa [#allocation5], 1

</llo_original>
